<compile_context>
chip_gen: v7x
topology: tpu7x:2x2x1
jax: 0.10.0
libtpu: 0.0.40
codegen_flags: <defaults>
</compile_context>

<pallas_src>
import functools

import jax
import jax.numpy as jnp
from jax.experimental import pallas as pl
from jax.experimental.pallas import tpu as pltpu


def _round_up(x, m):
    return (x + m - 1) // m * m


# ----------------------------- fused Pallas kernel ---------------------------

def _make_mlp_kernel(num_layers, apply_log_softmax):
    """Fused kernel. Args: (x_ref, w0, b0, ..., w_{L-1}, b_{L-1}, o_ref).

    x/weights are bf16 (lane-dense, 128-multiple widths); biases are f32. The final
    layer's padded bias lanes hold -1e30, so padded logits drop out of max/logsumexp
    with no explicit masking."""

    def kernel(*refs):
        x_ref = refs[0]
        o_ref = refs[-1]
        wb = refs[1:-1]

        h = x_ref[...]                                           # (TB, D_pad) bf16
        # Hidden layers: Linear + ReLU, kept as in-kernel values (no HBM round trips).
        for l in range(num_layers - 1):
            w = wb[2 * l][...]                                   # (K_pad, N_pad) bf16
            b = wb[2 * l + 1][...]                               # (1, N_pad)  f32
            z = jnp.dot(h, w, preferred_element_type=jnp.float32) + b
            # TODO(synk): F.dropout with training=True (enable_dropout) not implemented;
            #             eval-mode identity.
            h = jnp.maximum(z, 0.0).astype(jnp.bfloat16)

        # Final Linear; padded out lanes get exactly -1e30 (zero W cols + -1e30 bias).
        w = wb[-2][...]
        b = wb[-1][...]
        z = jnp.dot(h, w, preferred_element_type=jnp.float32) + b   # (TB, out_pad) f32

        if apply_log_softmax:
            m = jnp.max(z, axis=1, keepdims=True)                # padded lanes can't win
            e = jnp.exp(z - m)                                   # padded: exp(-1e30)->0
            lse = m + jnp.log(jnp.sum(e, axis=1, keepdims=True))
            z = z - lse

        o_ref[...] = z.astype(o_ref.dtype)

    return kernel


# --------------------------- Model (glue in JAX) ------------------------------

def init_mlp_params(key, input_dim, hidden_layer_sizes, num_classes=10,
                    width_ratio=1):
    """Deterministic init mirroring nn.Linear shapes.

    Returns list of (W, b) with W stored as (in_dim, out_dim) == torch W.T."""
    sizes = [input_dim] + [int(h / width_ratio) for h in hidden_layer_sizes] + [num_classes]
    params = []
    for i in range(len(sizes) - 1):
        d_in, d_out = sizes[i], sizes[i + 1]
        key, kw, kb = jax.random.split(key, 3)
        bound = 1.0 / jnp.sqrt(jnp.float32(d_in))     # torch default U(-1/sqrt(fan_in), ...)
        W = jax.random.uniform(kw, (d_in, d_out), jnp.float32, -bound, bound)
        b = jax.random.uniform(kb, (1, d_out), jnp.float32, -bound, bound)
        params.append((W, b))
    return params


@functools.partial(jax.jit,
                   static_argnames=("disable_logits", "block_b", "single_buffer_weights"))
def _mlp_forward_jit(x, params, disable_logits, block_b, single_buffer_weights):
    B = x.shape[0]
    x = x.reshape(B, -1).astype(jnp.float32)                 # x.view(B, -1)
    D_in = x.shape[1]
    num_layers = len(params)
    num_classes = params[-1][0].shape[1]

    D_pad = _round_up(D_in, 128)                              # lane-dense input width
    out_pad = _round_up(num_classes, 128)                     # lane-dense output width

    # Batch tile: multiple of 8 sublanes; up to block_b (256 fills v6e/v7x's 256x256 MXU).
    TB = min(block_b, _round_up(B, 8))
    if B > 8 and TB >= _round_up(B, 8):
        # A single grid step would defeat megacore (v7x) -> split the batch into >=2 tiles.
        TB = _round_up(-(-B // 2), 8)
    B_pad = _round_up(B, TB)

    # Zero-padded, lane-dense bf16 input tile (halves the per-step input DMA bytes).
    x_p = jnp.zeros((B_pad, D_pad), jnp.bfloat16).at[:B, :D_in].set(x.astype(jnp.bfloat16))

    # Host-side padding of weights/biases so every matmul is lane-dense / full-K:
    #   * hidden widths padded to 128 with zeros (zero cols -> z=0 -> ReLU(0)=0 -> zero rows
    #     contribute nothing downstream)
    #   * final layer: zero-padded W cols, -1e30-padded bias lanes (no in-kernel masking).
    inputs = [x_p]
    prev_pad = D_pad
    for li, (W, b) in enumerate(params):
        d_in, d_out = W.shape
        n_pad = _round_up(d_out, 128)
        Wp = jnp.zeros((prev_pad, n_pad), jnp.bfloat16).at[:d_in, :d_out].set(
            W.astype(jnp.bfloat16))
        fill = -1e30 if li == num_layers - 1 else 0.0
        bp = jnp.full((1, n_pad), fill, jnp.float32).at[:, :d_out].set(
            b.astype(jnp.float32).reshape(1, d_out))
        inputs.append(Wp)
        inputs.append(bp)
        prev_pad = n_pad

    # BlockSpecs: x / out tiled over the batch grid; weights/biases whole-array and
    # (when supported) single-buffered since their index_map is constant.
    def wb_spec(shape):
        if single_buffer_weights:
            return pl.BlockSpec(shape, lambda i: (0, 0), pipeline_mode=pl.Buffered(1))
        return pl.BlockSpec(shape, lambda i: (0, 0))

    in_specs = [pl.BlockSpec((TB, D_pad), lambda i: (i, 0))]
    in_specs += [wb_spec(a.shape) for a in inputs[1:]]

    # VMEM budget derived from the resident footprint (weights x buffer count +
    # double-buffered x/out tiles + live-activation headroom), capped below v7x's 64 MiB/TC.
    wb_bytes = sum(int(a.size) * a.dtype.itemsize for a in inputs[1:])
    wb_bytes *= 1 if single_buffer_weights else 2
    x_tile_bytes = 2 * TB * D_pad * 2
    o_tile_bytes = 2 * TB * out_pad * 4
    widest = max([D_pad, out_pad] + [int(a.shape[-1]) for a in inputs[1::2]])
    act_bytes = 4 * TB * widest * 4
    vmem_limit = wb_bytes + x_tile_bytes + o_tile_bytes + act_bytes + (2 << 20)
    vmem_limit = int(min(max(vmem_limit, 4 << 20), 56 << 20))

    kernel = _make_mlp_kernel(num_layers, apply_log_softmax=not disable_logits)

    out = pl.pallas_call(
        kernel,
        grid=(B_pad // TB,),
        in_specs=in_specs,
        out_specs=pl.BlockSpec((TB, out_pad), lambda i: (i, 0)),
        out_shape=jax.ShapeDtypeStruct((B_pad, out_pad), jnp.float32),
        compiler_params=pltpu.CompilerParams(
            dimension_semantics=("parallel",),      # batch axis -> megacore split on v7x
            vmem_limit_bytes=vmem_limit,
        ),
    )(*inputs)

    return out[:B, :num_classes]


def mlp_forward(x, params, disable_logits=False, block_b=256):
    """Equivalent of MlpNetFromConfig.forward (eval mode / enable_dropout=False)."""
    try:
        return _mlp_forward_jit(x, params, disable_logits=disable_logits,
                                block_b=block_b, single_buffer_weights=True)
    except Exception:
        # pl.Buffered(1) not supported by this jax/Mosaic build -> default double-buffering.
        return _mlp_forward_jit(x, params, disable_logits=disable_logits,
                                block_b=block_b, single_buffer_weights=False)


# Pure-JAX f32 reference for sanity checking.
def mlp_forward_ref(x, params, disable_logits=False):
    B = x.shape[0]
    x = x.reshape(B, -1).astype(jnp.float32)
    num_hidden = len(params) - 1
    for layer_idx in range(num_hidden):
        W, b = params[layer_idx]
        x = jnp.maximum(x @ W + b, 0.0)
    W, b = params[num_hidden]
    z = x @ W + b
    if disable_logits:
        return z
    return z - jax.scipy.special.logsumexp(z, axis=1, keepdims=True)


if __name__ == "__main__":
    key = jax.random.PRNGKey(0)

    # args.dataset == 'mnist' -> input_dim = 784; hidden_layer_sizes = [32, 32]
    input_dim = 784
    hidden_layer_sizes = [32, 32]
    batch = 2

    k_x, k_p = jax.random.split(key)
    x = jax.random.normal(k_x, (batch, 1, 28, 28), dtype=jnp.float32)   # MNIST-style NCHW
    params = init_mlp_params(k_p, input_dim, hidden_layer_sizes)

    # log_softmax path (default forward). bf16 matmul operands -> loosened tolerance.
    out = jax.block_until_ready(mlp_forward(x, params))
    ref = mlp_forward_ref(x, params)
    assert out.shape == (batch, 10), out.shape
    assert jnp.allclose(out, ref, atol=3e-2, rtol=3e-2), \
        f"max diff {jnp.max(jnp.abs(out - ref))}"
    assert jnp.allclose(jnp.sum(jnp.exp(out), axis=1), 1.0, atol=1e-3)

    # disable_logits=True path (raw logits)
    out_l = jax.block_until_ready(mlp_forward(x, params, disable_logits=True))
    ref_l = mlp_forward_ref(x, params, disable_logits=True)
    assert jnp.allclose(out_l, ref_l, atol=3e-2, rtol=3e-2), \
        f"max diff {jnp.max(jnp.abs(out_l - ref_l))}"

    print("KERNEL_OK")
</pallas_src>

<mosaic_0001>
module attributes {stable_mosaic.version = 11 : i64} {
  func.func @kernel(%arg0: i32, %arg1: memref<8x896xbf16, #tpu.memory_space<vmem>>, %arg2: memref<896x128xbf16, #tpu.memory_space<vmem>>, %arg3: memref<1x128xf32, #tpu.memory_space<vmem>>, %arg4: memref<128x128xbf16, #tpu.memory_space<vmem>>, %arg5: memref<1x128xf32, #tpu.memory_space<vmem>>, %arg6: memref<128x128xbf16, #tpu.memory_space<vmem>>, %arg7: memref<1x128xf32, #tpu.memory_space<vmem>>, %arg8: memref<8x128xf32, #tpu.memory_space<vmem>>) attributes {dimension_semantics = [#tpu.dimension_semantics<parallel>], iteration_bounds = array<i64: 1>, scalar_prefetch = 0 : i64, scratch_operands = 0 : i64, tpu.core_type = #tpu.core_type<tc>, window_params = [{transform_indices = @transform_0, window_bounds = array<i64: 8, 896>}, {pipeline_mode = #tpu.pipeline_mode<synchronous>, transform_indices = @transform_1, window_bounds = array<i64: 896, 128>}, {pipeline_mode = #tpu.pipeline_mode<synchronous>, transform_indices = @transform_2, window_bounds = array<i64: 1, 128>}, {pipeline_mode = #tpu.pipeline_mode<synchronous>, transform_indices = @transform_3, window_bounds = array<i64: 128, 128>}, {pipeline_mode = #tpu.pipeline_mode<synchronous>, transform_indices = @transform_4, window_bounds = array<i64: 1, 128>}, {pipeline_mode = #tpu.pipeline_mode<synchronous>, transform_indices = @transform_5, window_bounds = array<i64: 128, 128>}, {pipeline_mode = #tpu.pipeline_mode<synchronous>, transform_indices = @transform_6, window_bounds = array<i64: 1, 128>}, {transform_indices = @transform_7, window_bounds = array<i64: 8, 128>}]} {
    %c0 = arith.constant 0 : index
    %c0_0 = arith.constant 0 : index
    %0 = vector.load %arg1[%c0, %c0_0] : memref<8x896xbf16, #tpu.memory_space<vmem>>, vector<8x896xbf16>
    %c0_1 = arith.constant 0 : index
    %c0_2 = arith.constant 0 : index
    %1 = vector.load %arg2[%c0_1, %c0_2] : memref<896x128xbf16, #tpu.memory_space<vmem>>, vector<896x128xbf16>
    %c0_3 = arith.constant 0 : index
    %c0_4 = arith.constant 0 : index
    %2 = vector.load %arg3[%c0_3, %c0_4] : memref<1x128xf32, #tpu.memory_space<vmem>>, vector<1x128xf32>
    %cst = arith.constant dense<0.000000e+00> : vector<8x128xf32>
    %3 = tpu.matmul %0, %1, %cst {dimension_numbers = #tpu.dot_dimension_numbers<[1], [0], [0], [1], [0, 0, 1, 1], [], []>} : vector<8x896xbf16>, vector<896x128xbf16>, vector<8x128xf32> -> vector<8x128xf32>
    %4 = vector.broadcast %2 : vector<1x128xf32> to vector<8x128xf32>
    %5 = arith.addf %3, %4 : vector<8x128xf32>
    %cst_5 = arith.constant 0.000000e+00 : f32
    %6 = vector.broadcast %cst_5 : f32 to vector<8x128xf32>
    %7 = arith.maximumf %5, %6 : vector<8x128xf32>
    %8 = arith.truncf %7 : vector<8x128xf32> to vector<8x128xbf16>
    %c0_6 = arith.constant 0 : index
    %c0_7 = arith.constant 0 : index
    %9 = vector.load %arg4[%c0_6, %c0_7] : memref<128x128xbf16, #tpu.memory_space<vmem>>, vector<128x128xbf16>
    %c0_8 = arith.constant 0 : index
    %c0_9 = arith.constant 0 : index
    %10 = vector.load %arg5[%c0_8, %c0_9] : memref<1x128xf32, #tpu.memory_space<vmem>>, vector<1x128xf32>
    %cst_10 = arith.constant dense<0.000000e+00> : vector<8x128xf32>
    %11 = tpu.matmul %8, %9, %cst_10 {dimension_numbers = #tpu.dot_dimension_numbers<[1], [0], [0], [1], [0, 0, 1, 1], [], []>} : vector<8x128xbf16>, vector<128x128xbf16>, vector<8x128xf32> -> vector<8x128xf32>
    %12 = vector.broadcast %10 : vector<1x128xf32> to vector<8x128xf32>
    %13 = arith.addf %11, %12 : vector<8x128xf32>
    %cst_11 = arith.constant 0.000000e+00 : f32
    %14 = vector.broadcast %cst_11 : f32 to vector<8x128xf32>
    %15 = arith.maximumf %13, %14 : vector<8x128xf32>
    %16 = arith.truncf %15 : vector<8x128xf32> to vector<8x128xbf16>
    %c0_12 = arith.constant 0 : index
    %c0_13 = arith.constant 0 : index
    %17 = vector.load %arg6[%c0_12, %c0_13] : memref<128x128xbf16, #tpu.memory_space<vmem>>, vector<128x128xbf16>
    %c0_14 = arith.constant 0 : index
    %c0_15 = arith.constant 0 : index
    %18 = vector.load %arg7[%c0_14, %c0_15] : memref<1x128xf32, #tpu.memory_space<vmem>>, vector<1x128xf32>
    %cst_16 = arith.constant dense<0.000000e+00> : vector<8x128xf32>
    %19 = tpu.matmul %16, %17, %cst_16 {dimension_numbers = #tpu.dot_dimension_numbers<[1], [0], [0], [1], [0, 0, 1, 1], [], []>} : vector<8x128xbf16>, vector<128x128xbf16>, vector<8x128xf32> -> vector<8x128xf32>
    %20 = vector.broadcast %18 : vector<1x128xf32> to vector<8x128xf32>
    %21 = arith.addf %19, %20 : vector<8x128xf32>
    %cst_17 = arith.constant dense<0xFF800000> : vector<8xf32>
    %22 = vector.multi_reduction <maximumf>, %21, %cst_17 [1] : vector<8x128xf32> to vector<8xf32>
    %23 = vector.shape_cast %22 : vector<8xf32> to vector<8x1xf32>
    %24 = vector.broadcast %23 : vector<8x1xf32> to vector<8x128xf32>
    %25 = arith.subf %21, %24 : vector<8x128xf32>
    %26 = math.exp %25 : vector<8x128xf32>
    %cst_18 = arith.constant dense<0.000000e+00> : vector<8xf32>
    %27 = vector.multi_reduction <add>, %26, %cst_18 [1] : vector<8x128xf32> to vector<8xf32>
    %28 = vector.shape_cast %27 : vector<8xf32> to vector<8x1xf32>
    %29 = math.log %28 : vector<8x1xf32>
    %30 = arith.addf %23, %29 : vector<8x1xf32>
    %31 = vector.broadcast %30 : vector<8x1xf32> to vector<8x128xf32>
    %32 = arith.subf %21, %31 : vector<8x128xf32>
    %c0_19 = arith.constant 0 : index
    %c0_20 = arith.constant 0 : index
    %33 = vector.load %arg8[%c0_19, %c0_20] : memref<8x128xf32, #tpu.memory_space<vmem>>, vector<8x128xf32>
    tpu.vector_store %arg8[%c0_19, %c0_20], %32 {strides = array<i32>} : memref<8x128xf32, #tpu.memory_space<vmem>>, vector<8x128xf32>,
    return
  }
  func.func @transform_0(%arg0: i32) -> (i32, i32) {
    %c0_i32 = arith.constant 0 : i32
    %c0_i32_0 = arith.constant 0 : i32
    return %arg0, %c0_i32 : i32, i32
  }
  func.func @transform_1(%arg0: i32) -> (i32, i32) {
    %c0_i32 = arith.constant 0 : i32
    %c0_i32_0 = arith.constant 0 : i32
    %c0_i32_1 = arith.constant 0 : i32
    return %c0_i32, %c0_i32_0 : i32, i32
  }
  func.func @transform_2(%arg0: i32) -> (i32, i32) {
    %c0_i32 = arith.constant 0 : i32
    %c0_i32_0 = arith.constant 0 : i32
    %c0_i32_1 = arith.constant 0 : i32
    return %c0_i32, %c0_i32_0 : i32, i32
  }
  func.func @transform_3(%arg0: i32) -> (i32, i32) {
    %c0_i32 = arith.constant 0 : i32
    %c0_i32_0 = arith.constant 0 : i32
    %c0_i32_1 = arith.constant 0 : i32
    return %c0_i32, %c0_i32_0 : i32, i32
  }
  func.func @transform_4(%arg0: i32) -> (i32, i32) {
    %c0_i32 = arith.constant 0 : i32
    %c0_i32_0 = arith.constant 0 : i32
    %c0_i32_1 = arith.constant 0 : i32
    return %c0_i32, %c0_i32_0 : i32, i32
  }
  func.func @transform_5(%arg0: i32) -> (i32, i32) {
    %c0_i32 = arith.constant 0 : i32
    %c0_i32_0 = arith.constant 0 : i32
    %c0_i32_1 = arith.constant 0 : i32
    return %c0_i32, %c0_i32_0 : i32, i32
  }
  func.func @transform_6(%arg0: i32) -> (i32, i32) {
    %c0_i32 = arith.constant 0 : i32
    %c0_i32_0 = arith.constant 0 : i32
    %c0_i32_1 = arith.constant 0 : i32
    return %c0_i32, %c0_i32_0 : i32, i32
  }
  func.func @transform_7(%arg0: i32) -> (i32, i32) {
    %c0_i32 = arith.constant 0 : i32
    %c0_i32_0 = arith.constant 0 : i32
    return %arg0, %c0_i32 : i32, i32
  }
}

module attributes {stable_mosaic.version = 11 : i64} {
  func.func @kernel(%arg0: i32, %arg1: memref<8x896xbf16, #tpu.memory_space<vmem>>, %arg2: memref<896x128xbf16, #tpu.memory_space<vmem>>, %arg3: memref<1x128xf32, #tpu.memory_space<vmem>>, %arg4: memref<128x128xbf16, #tpu.memory_space<vmem>>, %arg5: memref<1x128xf32, #tpu.memory_space<vmem>>, %arg6: memref<128x128xbf16, #tpu.memory_space<vmem>>, %arg7: memref<1x128xf32, #tpu.memory_space<vmem>>, %arg8: memref<8x128xf32, #tpu.memory_space<vmem>>) attributes {dimension_semantics = [#tpu.dimension_semantics<parallel>], iteration_bounds = array<i64: 1>, scalar_prefetch = 0 : i64, scratch_operands = 0 : i64, tpu.core_type = #tpu.core_type<tc>, window_params = [{transform_indices = @transform_0, window_bounds = array<i64: 8, 896>}, {pipeline_mode = #tpu.pipeline_mode<synchronous>, transform_indices = @transform_1, window_bounds = array<i64: 896, 128>}, {pipeline_mode = #tpu.pipeline_mode<synchronous>, transform_indices = @transform_2, window_bounds = array<i64: 1, 128>}, {pipeline_mode = #tpu.pipeline_mode<synchronous>, transform_indices = @transform_3, window_bounds = array<i64: 128, 128>}, {pipeline_mode = #tpu.pipeline_mode<synchronous>, transform_indices = @transform_4, window_bounds = array<i64: 1, 128>}, {pipeline_mode = #tpu.pipeline_mode<synchronous>, transform_indices = @transform_5, window_bounds = array<i64: 128, 128>}, {pipeline_mode = #tpu.pipeline_mode<synchronous>, transform_indices = @transform_6, window_bounds = array<i64: 1, 128>}, {transform_indices = @transform_7, window_bounds = array<i64: 8, 128>}]} {
    %c0 = arith.constant 0 : index
    %c0_0 = arith.constant 0 : index
    %0 = vector.load %arg1[%c0, %c0_0] : memref<8x896xbf16, #tpu.memory_space<vmem>>, vector<8x896xbf16>
    %c0_1 = arith.constant 0 : index
    %c0_2 = arith.constant 0 : index
    %1 = vector.load %arg2[%c0_1, %c0_2] : memref<896x128xbf16, #tpu.memory_space<vmem>>, vector<896x128xbf16>
    %c0_3 = arith.constant 0 : index
    %c0_4 = arith.constant 0 : index
    %2 = vector.load %arg3[%c0_3, %c0_4] : memref<1x128xf32, #tpu.memory_space<vmem>>, vector<1x128xf32>
    %cst = arith.constant dense<0.000000e+00> : vector<8x128xf32>
    %3 = tpu.matmul %0, %1, %cst {dimension_numbers = #tpu.dot_dimension_numbers<[1], [0], [0], [1], [0, 0, 1, 1], [], []>} : vector<8x896xbf16>, vector<896x128xbf16>, vector<8x128xf32> -> vector<8x128xf32>
    %4 = vector.broadcast %2 : vector<1x128xf32> to vector<8x128xf32>
    %5 = arith.addf %3, %4 : vector<8x128xf32>
    %cst_5 = arith.constant 0.000000e+00 : f32
    %6 = vector.broadcast %cst_5 : f32 to vector<8x128xf32>
    %7 = arith.maximumf %5, %6 : vector<8x128xf32>
    %8 = arith.truncf %7 : vector<8x128xf32> to vector<8x128xbf16>
    %c0_6 = arith.constant 0 : index
    %c0_7 = arith.constant 0 : index
    %9 = vector.load %arg4[%c0_6, %c0_7] : memref<128x128xbf16, #tpu.memory_space<vmem>>, vector<128x128xbf16>
    %c0_8 = arith.constant 0 : index
    %c0_9 = arith.constant 0 : index
    %10 = vector.load %arg5[%c0_8, %c0_9] : memref<1x128xf32, #tpu.memory_space<vmem>>, vector<1x128xf32>
    %cst_10 = arith.constant dense<0.000000e+00> : vector<8x128xf32>
    %11 = tpu.matmul %8, %9, %cst_10 {dimension_numbers = #tpu.dot_dimension_numbers<[1], [0], [0], [1], [0, 0, 1, 1], [], []>} : vector<8x128xbf16>, vector<128x128xbf16>, vector<8x128xf32> -> vector<8x128xf32>
    %12 = vector.broadcast %10 : vector<1x128xf32> to vector<8x128xf32>
    %13 = arith.addf %11, %12 : vector<8x128xf32>
    %cst_11 = arith.constant 0.000000e+00 : f32
    %14 = vector.broadcast %cst_11 : f32 to vector<8x128xf32>
    %15 = arith.maximumf %13, %14 : vector<8x128xf32>
    %16 = arith.truncf %15 : vector<8x128xf32> to vector<8x128xbf16>
    %c0_12 = arith.constant 0 : index
    %c0_13 = arith.constant 0 : index
    %17 = vector.load %arg6[%c0_12, %c0_13] : memref<128x128xbf16, #tpu.memory_space<vmem>>, vector<128x128xbf16>
    %c0_14 = arith.constant 0 : index
    %c0_15 = arith.constant 0 : index
    %18 = vector.load %arg7[%c0_14, %c0_15] : memref<1x128xf32, #tpu.memory_space<vmem>>, vector<1x128xf32>
    %cst_16 = arith.constant dense<0.000000e+00> : vector<8x128xf32>
    %19 = tpu.matmul %16, %17, %cst_16 {dimension_numbers = #tpu.dot_dimension_numbers<[1], [0], [0], [1], [0, 0, 1, 1], [], []>} : vector<8x128xbf16>, vector<128x128xbf16>, vector<8x128xf32> -> vector<8x128xf32>
    %20 = vector.broadcast %18 : vector<1x128xf32> to vector<8x128xf32>
    %21 = arith.addf %19, %20 : vector<8x128xf32>
    %cst_17 = arith.constant dense<0xFF800000> : vector<8xf32>
    %22 = vector.multi_reduction <maximumf>, %21, %cst_17 [1] : vector<8x128xf32> to vector<8xf32>
    %23 = vector.shape_cast %22 : vector<8xf32> to vector<8x1xf32>
    %24 = vector.broadcast %23 : vector<8x1xf32> to vector<8x128xf32>
    %25 = arith.subf %21, %24 : vector<8x128xf32>
    %26 = math.exp %25 : vector<8x128xf32>
    %cst_18 = arith.constant dense<0.000000e+00> : vector<8xf32>
    %27 = vector.multi_reduction <add>, %26, %cst_18 [1] : vector<8x128xf32> to vector<8xf32>
    %28 = vector.shape_cast %27 : vector<8xf32> to vector<8x1xf32>
    %29 = math.log %28 : vector<8x1xf32>
    %30 = arith.addf %23, %29 : vector<8x1xf32>
    %31 = vector.broadcast %30 : vector<8x1xf32> to vector<8x128xf32>
    %32 = arith.subf %21, %31 : vector<8x128xf32>
    %c0_19 = arith.constant 0 : index
    %c0_20 = arith.constant 0 : index
    %33 = vector.load %arg8[%c0_19, %c0_20] : memref<8x128xf32, #tpu.memory_space<vmem>>, vector<8x128xf32>
    tpu.vector_store %arg8[%c0_19, %c0_20], %32 {strides = array<i32>} : memref<8x128xf32, #tpu.memory_space<vmem>>, vector<8x128xf32>,
    return
  }
  func.func @transform_0(%arg0: i32) -> (i32, i32) {
    %c0_i32 = arith.constant 0 : i32
    %c0_i32_0 = arith.constant 0 : i32
    return %arg0, %c0_i32 : i32, i32
  }
  func.func @transform_1(%arg0: i32) -> (i32, i32) {
    %c0_i32 = arith.constant 0 : i32
    %c0_i32_0 = arith.constant 0 : i32
    %c0_i32_1 = arith.constant 0 : i32
    return %c0_i32, %c0_i32_0 : i32, i32
  }
  func.func @transform_2(%arg0: i32) -> (i32, i32) {
    %c0_i32 = arith.constant 0 : i32
    %c0_i32_0 = arith.constant 0 : i32
    %c0_i32_1 = arith.constant 0 : i32
    return %c0_i32, %c0_i32_0 : i32, i32
  }
  func.func @transform_3(%arg0: i32) -> (i32, i32) {
    %c0_i32 = arith.constant 0 : i32
    %c0_i32_0 = arith.constant 0 : i32
    %c0_i32_1 = arith.constant 0 : i32
    return %c0_i32, %c0_i32_0 : i32, i32
  }
  func.func @transform_4(%arg0: i32) -> (i32, i32) {
    %c0_i32 = arith.constant 0 : i32
    %c0_i32_0 = arith.constant 0 : i32
    %c0_i32_1 = arith.constant 0 : i32
    return %c0_i32, %c0_i32_0 : i32, i32
  }
  func.func @transform_5(%arg0: i32) -> (i32, i32) {
    %c0_i32 = arith.constant 0 : i32
    %c0_i32_0 = arith.constant 0 : i32
    %c0_i32_1 = arith.constant 0 : i32
    return %c0_i32, %c0_i32_0 : i32, i32
  }
  func.func @transform_6(%arg0: i32) -> (i32, i32) {
    %c0_i32 = arith.constant 0 : i32
    %c0_i32_0 = arith.constant 0 : i32
    %c0_i32_1 = arith.constant 0 : i32
    return %c0_i32, %c0_i32_0 : i32, i32
  }
  func.func @transform_7(%arg0: i32) -> (i32, i32) {
    %c0_i32 = arith.constant 0 : i32
    %c0_i32_0 = arith.constant 0 : i32
    return %arg0, %c0_i32 : i32, i32
  }
}

</mosaic_0001>

<llo_original>
// kernel: _mlp_forward_jit.1
$region0: #{_mlp_forward_jit.1}
  #allocation0 [shape = 'u32[]', space=smem, size = 0x4, offset = 0x4, fixed_abs, tag = 'smem constant byte address 0x4 - core index']
  #allocation1 [shape = 'u32[144,128]{1,0:T(1,128)}', space=vmem, size = 0x12000, scoped, tag = 'internal scratch']
  %s0 = inlined_call_operand.vmem [shape: bf16[8,896], index: 0, kind: input, shape index: {}]
  %s1 = inlined_call_operand.vmem [shape: bf16[896,128], index: 1, kind: input, shape index: {}]
  %s2 = inlined_call_operand.vmem [shape: f32[1,128], index: 2, kind: input, shape index: {}]
  %s3 = inlined_call_operand.vmem [shape: bf16[128,128], index: 3, kind: input, shape index: {}]
  %s4 = inlined_call_operand.vmem [shape: f32[1,128], index: 4, kind: input, shape index: {}]
  %s5 = inlined_call_operand.vmem [shape: bf16[128,128], index: 5, kind: input, shape index: {}]
  %s6 = inlined_call_operand.vmem [shape: f32[1,128], index: 6, kind: input, shape index: {}]
  %s7 = inlined_call_operand.vmem [shape: f32[8,128], index: 7, kind: output, shape index: {}]
  %s8 = sld [smem:[#allocation0]]
  $region38: #{_mlp_forward_jit.1} parent=0
    _
  %s10 = ssub.s32 1, %s8
  %s11 = scalar_select 0, %s10, %s8
  // Predicated region
  $region2: #{_mlp_forward_jit.1} parent=0 // pred_check
    _
  $region3: #{_mlp_forward_jit.1} parent=0 // pred_check_branch
    %13 = sbr.rel (0) target = $region5
  $region4: #{_mlp_forward_jit.1} parent=0 // pred_region
    _
  $region5: #{_mlp_forward_jit.1} parent=0 // pred_fallthru
    _
  // Predicated region
  $region6: #{_mlp_forward_jit.1} parent=0 // pred_check
    _
  $region7: #{_mlp_forward_jit.1} parent=0 // pred_check_branch
    %15 = sbr.rel (0) target = $region9
  $region8: #{_mlp_forward_jit.1} parent=0 // pred_region
    _
  $region9: #{_mlp_forward_jit.1} parent=0 // pred_fallthru
    _
  // Predicated region
  $region10: #{_mlp_forward_jit.1} parent=0 // pred_check
    _
  $region11: #{_mlp_forward_jit.1} parent=0 // pred_check_branch
    %17 = sbr.rel (0) target = $region13
  $region12: #{_mlp_forward_jit.1} parent=0 // pred_region
    _
  $region13: #{_mlp_forward_jit.1} parent=0 // pred_fallthru
    _
  // Predicated region
  $region14: #{_mlp_forward_jit.1} parent=0 // pred_check
    _
  $region15: #{_mlp_forward_jit.1} parent=0 // pred_check_branch
    %19 = sbr.rel (0) target = $region17
  $region16: #{_mlp_forward_jit.1} parent=0 // pred_region
    _
  $region17: #{_mlp_forward_jit.1} parent=0 // pred_fallthru
    _
  // Predicated region
  $region18: #{_mlp_forward_jit.1} parent=0 // pred_check
    _
  $region19: #{_mlp_forward_jit.1} parent=0 // pred_check_branch
    %21 = sbr.rel (0) target = $region21
  $region20: #{_mlp_forward_jit.1} parent=0 // pred_region
    _
  $region21: #{_mlp_forward_jit.1} parent=0 // pred_fallthru
    _
  // Predicated region
  $region22: #{_mlp_forward_jit.1} parent=0 // pred_check
    _
  $region23: #{_mlp_forward_jit.1} parent=0 // pred_check_branch
    %23 = sbr.rel (0) target = $region25
  $region24: #{_mlp_forward_jit.1} parent=0 // pred_region
    _
  $region25: #{_mlp_forward_jit.1} parent=0 // pred_fallthru
    _
  // Predicated region
  $region26: #{_mlp_forward_jit.1} parent=0 // pred_check
    _
  $region27: #{_mlp_forward_jit.1} parent=0 // pred_check_branch
    %25 = sbr.rel (0) target = $region29
  $region28: #{_mlp_forward_jit.1} parent=0 // pred_region
    _
  $region29: #{_mlp_forward_jit.1} parent=0 // pred_fallthru
    _
  %v27 = vld [vmem:[%s0] sm:$0xff]
  %v28 = vld [vmem:[%s0 + $0x8] sm:$0xff]
  %v29 = vld [vmem:[%s0 + $0x10] sm:$0xff]
  %v30 = vld [vmem:[%s0 + $0x18] sm:$0xf]
  %v31 = vld [vmem:[%s1] sm:$0xf]
  %v32 = vld [vmem:[%s1 + $0x4] sm:$0xf]
  %v33 = vld [vmem:[%s1 + $0x8] sm:$0xf]
  %v34 = vld [vmem:[%s1 + $0xc] sm:$0xf]
  %v35 = vld [vmem:[%s1 + $0x10] sm:$0xf]
  %v36 = vld [vmem:[%s1 + $0x14] sm:$0xf]
  %v37 = vld [vmem:[%s1 + $0x18] sm:$0xf]
  %v38 = vld [vmem:[%s1 + $0x1c] sm:$0xf]
  %v39 = vld [vmem:[%s1 + $0x20] sm:$0xf]
  %v40 = vld [vmem:[%s1 + $0x24] sm:$0xf]
  %v41 = vld [vmem:[%s1 + $0x28] sm:$0xf]
  %v42 = vld [vmem:[%s1 + $0x2c] sm:$0xf]
  %v43 = vld [vmem:[%s1 + $0x30] sm:$0xf]
  %v44 = vld [vmem:[%s1 + $0x34] sm:$0xf]
  %v45 = vld [vmem:[%s1 + $0x38] sm:$0xf]
  %v46 = vld [vmem:[%s1 + $0x3c] sm:$0xf]
  %v47 = vld [vmem:[%s1 + $0x40] sm:$0xf]
  %v48 = vld [vmem:[%s1 + $0x44] sm:$0xf]
  %v49 = vld [vmem:[%s1 + $0x48] sm:$0xf]
  %v50 = vld [vmem:[%s1 + $0x4c] sm:$0xf]
  %v51 = vld [vmem:[%s1 + $0x50] sm:$0xf]
  %v52 = vld [vmem:[%s1 + $0x54] sm:$0xf]
  %v53 = vld [vmem:[%s1 + $0x58] sm:$0xf]
  %v54 = vld [vmem:[%s1 + $0x5c] sm:$0xf]
  %v55 = vld [vmem:[%s1 + $0x60] sm:$0xf]
  %v56 = vld [vmem:[%s1 + $0x64] sm:$0xf]
  %v57 = vld [vmem:[%s1 + $0x68] sm:$0xf]
  %v58 = vld [vmem:[%s1 + $0x6c] sm:$0xf]
  %v59 = vld [vmem:[%s1 + $0x70] sm:$0xf]
  %v60 = vld [vmem:[%s1 + $0x74] sm:$0xf]
  %v61 = vld [vmem:[%s1 + $0x78] sm:$0xf]
  %v62 = vld [vmem:[%s1 + $0x7c] sm:$0xf]
  %v63 = vld [vmem:[%s1 + $0x80] sm:$0xf]
  %v64 = vld [vmem:[%s1 + $0x84] sm:$0xf]
  %v65 = vld [vmem:[%s1 + $0x88] sm:$0xf]
  %v66 = vld [vmem:[%s1 + $0x8c] sm:$0xf]
  %v67 = vld [vmem:[%s1 + $0x90] sm:$0xf]
  %v68 = vld [vmem:[%s1 + $0x94] sm:$0xf]
  %v69 = vld [vmem:[%s1 + $0x98] sm:$0xf]
  %v70 = vld [vmem:[%s1 + $0x9c] sm:$0xf]
  %v71 = vld [vmem:[%s1 + $0xa0] sm:$0xf]
  %v72 = vld [vmem:[%s1 + $0xa4] sm:$0xf]
  %v73 = vld [vmem:[%s1 + $0xa8] sm:$0xf]
  %v74 = vld [vmem:[%s1 + $0xac] sm:$0xf]
  %v75 = vld [vmem:[%s1 + $0xb0] sm:$0xf]
  %v76 = vld [vmem:[%s1 + $0xb4] sm:$0xf]
  %v77 = vld [vmem:[%s1 + $0xb8] sm:$0xf]
  %v78 = vld [vmem:[%s1 + $0xbc] sm:$0xf]
  %v79 = vld [vmem:[%s1 + $0xc0] sm:$0xf]
  %v80 = vld [vmem:[%s1 + $0xc4] sm:$0xf]
  %v81 = vld [vmem:[%s1 + $0xc8] sm:$0xf]
  %v82 = vld [vmem:[%s1 + $0xcc] sm:$0xf]
  %v83 = vld [vmem:[%s1 + $0xd0] sm:$0xf]
  %v84 = vld [vmem:[%s1 + $0xd4] sm:$0xf]
  %v85 = vld [vmem:[%s1 + $0xd8] sm:$0xf]
  %v86 = vld [vmem:[%s1 + $0xdc] sm:$0xf]
  %v87 = vld [vmem:[%s1 + $0xe0] sm:$0xf]
  %v88 = vld [vmem:[%s1 + $0xe4] sm:$0xf]
  %v89 = vld [vmem:[%s1 + $0xe8] sm:$0xf]
  %v90 = vld [vmem:[%s1 + $0xec] sm:$0xf]
  %v91 = vld [vmem:[%s1 + $0xf0] sm:$0xf]
  %v92 = vld [vmem:[%s1 + $0xf4] sm:$0xf]
  %v93 = vld [vmem:[%s1 + $0xf8] sm:$0xf]
  %v94 = vld [vmem:[%s1 + $0xfc] sm:$0xf]
  %v95 = vld [vmem:[%s1 + $0x100] sm:$0xf]
  %v96 = vld [vmem:[%s1 + $0x104] sm:$0xf]
  %v97 = vld [vmem:[%s1 + $0x108] sm:$0xf]
  %v98 = vld [vmem:[%s1 + $0x10c] sm:$0xf]
  %v99 = vld [vmem:[%s1 + $0x110] sm:$0xf]
  %v100 = vld [vmem:[%s1 + $0x114] sm:$0xf]
  %v101 = vld [vmem:[%s1 + $0x118] sm:$0xf]
  %v102 = vld [vmem:[%s1 + $0x11c] sm:$0xf]
  %v103 = vld [vmem:[%s1 + $0x120] sm:$0xf]
  %v104 = vld [vmem:[%s1 + $0x124] sm:$0xf]
  %v105 = vld [vmem:[%s1 + $0x128] sm:$0xf]
  %v106 = vld [vmem:[%s1 + $0x12c] sm:$0xf]
  %v107 = vld [vmem:[%s1 + $0x130] sm:$0xf]
  %v108 = vld [vmem:[%s1 + $0x134] sm:$0xf]
  %v109 = vld [vmem:[%s1 + $0x138] sm:$0xf]
  %v110 = vld [vmem:[%s1 + $0x13c] sm:$0xf]
  %v111 = vld [vmem:[%s1 + $0x140] sm:$0xf]
  %v112 = vld [vmem:[%s1 + $0x144] sm:$0xf]
  %v113 = vld [vmem:[%s1 + $0x148] sm:$0xf]
  %v114 = vld [vmem:[%s1 + $0x14c] sm:$0xf]
  %v115 = vld [vmem:[%s1 + $0x150] sm:$0xf]
  %v116 = vld [vmem:[%s1 + $0x154] sm:$0xf]
  %v117 = vld [vmem:[%s1 + $0x158] sm:$0xf]
  %v118 = vld [vmem:[%s1 + $0x15c] sm:$0xf]
  %v119 = vld [vmem:[%s1 + $0x160] sm:$0xf]
  %v120 = vld [vmem:[%s1 + $0x164] sm:$0xf]
  %v121 = vld [vmem:[%s1 + $0x168] sm:$0xf]
  %v122 = vld [vmem:[%s1 + $0x16c] sm:$0xf]
  %v123 = vld [vmem:[%s1 + $0x170] sm:$0xf]
  %v124 = vld [vmem:[%s1 + $0x174] sm:$0xf]
  %v125 = vld [vmem:[%s1 + $0x178] sm:$0xf]
  %v126 = vld [vmem:[%s1 + $0x17c] sm:$0xf]
  %v127 = vld [vmem:[%s1 + $0x180] sm:$0xf]
  %v128 = vld [vmem:[%s1 + $0x184] sm:$0xf]
  %v129 = vld [vmem:[%s1 + $0x188] sm:$0xf]
  %v130 = vld [vmem:[%s1 + $0x18c] sm:$0xf]
  %v131 = vld [vmem:[%s1 + $0x190] sm:$0xf]
  %v132 = vld [vmem:[%s1 + $0x194] sm:$0xf]
  %v133 = vld [vmem:[%s1 + $0x198] sm:$0xf]
  %v134 = vld [vmem:[%s1 + $0x19c] sm:$0xf]
  %v135 = vld [vmem:[%s1 + $0x1a0] sm:$0xf]
  %v136 = vld [vmem:[%s1 + $0x1a4] sm:$0xf]
  %v137 = vld [vmem:[%s1 + $0x1a8] sm:$0xf]
  %v138 = vld [vmem:[%s1 + $0x1ac] sm:$0xf]
  %v139 = vld [vmem:[%s1 + $0x1b0] sm:$0xf]
  %v140 = vld [vmem:[%s1 + $0x1b4] sm:$0xf]
  %v141 = vld [vmem:[%s1 + $0x1b8] sm:$0xf]
  %v142 = vld [vmem:[%s1 + $0x1bc] sm:$0xf]
  %v143 = vld [vmem:[%s2] sm:$0x1]
  %v145 = vlaneseq
  %v146 = vshrl.u32 %v145, 7
  %v147 = vsub.s32 0, %v146
  %v148 = vrot.slane %v143, %v147
  %v154 = vunpack.c.l.b16 %v27
  %v155 = vunpack.c.h.b16 %v27
  %v156 = vunpack.c.l.b16 %v28
  %v157 = vunpack.c.h.b16 %v28
  %v158 = vunpack.c.l.b16 %v29
  %v159 = vunpack.c.h.b16 %v29
  %v160 = vunpack.c.l.b16 %v30
  %v161 = vpack.c.b16 %v154, %v154
  %v162 = vpack.c.b16 %v155, %v155
  %v163 = vpack.c.b16 %v156, %v156
  %v164 = vpack.c.b16 %v157, %v157
  %v165 = vpack.c.b16 %v158, %v158
  %v166 = vpack.c.b16 %v159, %v159
  %v167 = vpack.c.b16 %v160, %v160
  %v287 = vunpack.c.l.b16 %v31
  %v288 = vunpack.c.l.b16 %v32
  %v289 = vunpack.c.l.b16 %v33
  %v290 = vunpack.c.l.b16 %v34
  %v291 = vunpack.c.l.b16 %v35
  %v292 = vunpack.c.l.b16 %v36
  %v293 = vunpack.c.l.b16 %v37
  %v294 = vunpack.c.l.b16 %v38
  %v295 = vunpack.c.l.b16 %v39
  %v296 = vunpack.c.l.b16 %v40
  %v297 = vunpack.c.l.b16 %v41
  %v298 = vunpack.c.l.b16 %v42
  %v299 = vunpack.c.l.b16 %v43
  %v300 = vunpack.c.l.b16 %v44
  %v301 = vunpack.c.l.b16 %v45
  %v302 = vunpack.c.l.b16 %v46
  %v303 = vunpack.c.l.b16 %v47
  %v304 = vunpack.c.l.b16 %v48
  %v305 = vunpack.c.l.b16 %v49
  %v306 = vunpack.c.l.b16 %v50
  %v307 = vunpack.c.l.b16 %v51
  %v308 = vunpack.c.l.b16 %v52
  %v309 = vunpack.c.l.b16 %v53
  %v310 = vunpack.c.l.b16 %v54
  %v311 = vunpack.c.l.b16 %v55
  %v312 = vunpack.c.l.b16 %v56
  %v313 = vunpack.c.l.b16 %v57
  %v314 = vunpack.c.l.b16 %v58
  %v315 = vunpack.c.l.b16 %v59
  %v316 = vunpack.c.l.b16 %v60
  %v317 = vunpack.c.l.b16 %v61
  %v318 = vunpack.c.l.b16 %v62
  %v319 = vunpack.c.l.b16 %v63
  %v320 = vunpack.c.l.b16 %v64
  %v321 = vunpack.c.l.b16 %v65
  %v322 = vunpack.c.l.b16 %v66
  %v323 = vunpack.c.l.b16 %v67
  %v324 = vunpack.c.l.b16 %v68
  %v325 = vunpack.c.l.b16 %v69
  %v326 = vunpack.c.l.b16 %v70
  %v327 = vunpack.c.l.b16 %v71
  %v328 = vunpack.c.l.b16 %v72
  %v329 = vunpack.c.l.b16 %v73
  %v330 = vunpack.c.l.b16 %v74
  %v331 = vunpack.c.l.b16 %v75
  %v332 = vunpack.c.l.b16 %v76
  %v333 = vunpack.c.l.b16 %v77
  %v334 = vunpack.c.l.b16 %v78
  %v335 = vunpack.c.l.b16 %v79
  %v336 = vunpack.c.l.b16 %v80
  %v337 = vunpack.c.l.b16 %v81
  %v338 = vunpack.c.l.b16 %v82
  %v339 = vunpack.c.l.b16 %v83
  %v340 = vunpack.c.l.b16 %v84
  %v341 = vunpack.c.l.b16 %v85
  %v342 = vunpack.c.l.b16 %v86
  %v343 = vunpack.c.l.b16 %v87
  %v344 = vunpack.c.l.b16 %v88
  %v345 = vunpack.c.l.b16 %v89
  %v346 = vunpack.c.l.b16 %v90
  %v347 = vunpack.c.l.b16 %v91
  %v348 = vunpack.c.l.b16 %v92
  %v349 = vunpack.c.l.b16 %v93
  %v350 = vunpack.c.l.b16 %v94
  %v351 = vunpack.c.l.b16 %v95
  %v352 = vunpack.c.l.b16 %v96
  %v353 = vunpack.c.l.b16 %v97
  %v354 = vunpack.c.l.b16 %v98
  %v355 = vunpack.c.l.b16 %v99
  %v356 = vunpack.c.l.b16 %v100
  %v357 = vunpack.c.l.b16 %v101
  %v358 = vunpack.c.l.b16 %v102
  %v359 = vunpack.c.l.b16 %v103
  %v360 = vunpack.c.l.b16 %v104
  %v361 = vunpack.c.l.b16 %v105
  %v362 = vunpack.c.l.b16 %v106
  %v363 = vunpack.c.l.b16 %v107
  %v364 = vunpack.c.l.b16 %v108
  %v365 = vunpack.c.l.b16 %v109
  %v366 = vunpack.c.l.b16 %v110
  %v367 = vunpack.c.l.b16 %v111
  %v368 = vunpack.c.l.b16 %v112
  %v369 = vunpack.c.l.b16 %v113
  %v370 = vunpack.c.l.b16 %v114
  %v371 = vunpack.c.l.b16 %v115
  %v372 = vunpack.c.l.b16 %v116
  %v373 = vunpack.c.l.b16 %v117
  %v374 = vunpack.c.l.b16 %v118
  %v375 = vunpack.c.l.b16 %v119
  %v376 = vunpack.c.l.b16 %v120
  %v377 = vunpack.c.l.b16 %v121
  %v378 = vunpack.c.l.b16 %v122
  %v379 = vunpack.c.l.b16 %v123
  %v380 = vunpack.c.l.b16 %v124
  %v381 = vunpack.c.l.b16 %v125
  %v382 = vunpack.c.l.b16 %v126
  %v383 = vunpack.c.l.b16 %v127
  %v384 = vunpack.c.l.b16 %v128
  %v385 = vunpack.c.l.b16 %v129
  %v386 = vunpack.c.l.b16 %v130
  %v387 = vunpack.c.l.b16 %v131
  %v388 = vunpack.c.l.b16 %v132
  %v389 = vunpack.c.l.b16 %v133
  %v390 = vunpack.c.l.b16 %v134
  %v391 = vunpack.c.l.b16 %v135
  %v392 = vunpack.c.l.b16 %v136
  %v393 = vunpack.c.l.b16 %v137
  %v394 = vunpack.c.l.b16 %v138
  %v395 = vunpack.c.l.b16 %v139
  %v396 = vunpack.c.l.b16 %v140
  %v397 = vunpack.c.l.b16 %v141
  %v398 = vunpack.c.l.b16 %v142
  %v399 = vpack.c.b16 %v288, %v287
  %v400 = vpack.c.b16 %v290, %v289
  %v401 = vpack.c.b16 %v292, %v291
  %v402 = vpack.c.b16 %v294, %v293
  %v403 = vpack.c.b16 %v296, %v295
  %v404 = vpack.c.b16 %v298, %v297
  %v405 = vpack.c.b16 %v300, %v299
  %v406 = vpack.c.b16 %v302, %v301
  %v407 = vpack.c.b16 %v304, %v303
  %v408 = vpack.c.b16 %v306, %v305
  %v409 = vpack.c.b16 %v308, %v307
  %v410 = vpack.c.b16 %v310, %v309
  %v411 = vpack.c.b16 %v312, %v311
  %v412 = vpack.c.b16 %v314, %v313
  %v413 = vpack.c.b16 %v316, %v315
  %v414 = vpack.c.b16 %v318, %v317
  %v415 = vpack.c.b16 %v320, %v319
  %v416 = vpack.c.b16 %v322, %v321
  %v417 = vpack.c.b16 %v324, %v323
  %v418 = vpack.c.b16 %v326, %v325
  %v419 = vpack.c.b16 %v328, %v327
  %v420 = vpack.c.b16 %v330, %v329
  %v421 = vpack.c.b16 %v332, %v331
  %v422 = vpack.c.b16 %v334, %v333
  %v423 = vpack.c.b16 %v336, %v335
  %v424 = vpack.c.b16 %v338, %v337
  %v425 = vpack.c.b16 %v340, %v339
  %v426 = vpack.c.b16 %v342, %v341
  %v427 = vpack.c.b16 %v344, %v343
  %v428 = vpack.c.b16 %v346, %v345
  %v429 = vpack.c.b16 %v348, %v347
  %v430 = vpack.c.b16 %v350, %v349
  %v431 = vpack.c.b16 %v352, %v351
  %v432 = vpack.c.b16 %v354, %v353
  %v433 = vpack.c.b16 %v356, %v355
  %v434 = vpack.c.b16 %v358, %v357
  %v435 = vpack.c.b16 %v360, %v359
  %v436 = vpack.c.b16 %v362, %v361
  %v437 = vpack.c.b16 %v364, %v363
  %v438 = vpack.c.b16 %v366, %v365
  %v439 = vpack.c.b16 %v368, %v367
  %v440 = vpack.c.b16 %v370, %v369
  %v441 = vpack.c.b16 %v372, %v371
  %v442 = vpack.c.b16 %v374, %v373
  %v443 = vpack.c.b16 %v376, %v375
  %v444 = vpack.c.b16 %v378, %v377
  %v445 = vpack.c.b16 %v380, %v379
  %v446 = vpack.c.b16 %v382, %v381
  %v447 = vpack.c.b16 %v384, %v383
  %v448 = vpack.c.b16 %v386, %v385
  %v449 = vpack.c.b16 %v388, %v387
  %v450 = vpack.c.b16 %v390, %v389
  %v451 = vpack.c.b16 %v392, %v391
  %v452 = vpack.c.b16 %v394, %v393
  %v453 = vpack.c.b16 %v396, %v395
  %v454 = vpack.c.b16 %v398, %v397
  %511 = vmatprep.subr.bf16.mxu0 0
  %512 = vmatpush1.bf16.msra.mxu0 %v399
  %513 = vmatprep.subr.bf16.mxu0 0
  %514 = vmatpush1.bf16.msra.mxu0 %v400
  %515 = vmatprep.subr.bf16.mxu0 0
  %516 = vmatpush1.bf16.msra.mxu0 %v401
  %517 = vmatprep.subr.bf16.mxu0 0
  %518 = vmatpush1.bf16.msra.mxu0 %v402
  %519 = vmatprep.subr.bf16.mxu0 0
  %520 = vmatpush1.bf16.msra.mxu0 %v403
  %521 = vmatprep.subr.bf16.mxu0 0
  %522 = vmatpush1.bf16.msra.mxu0 %v404
  %523 = vmatprep.subr.bf16.mxu0 0
  %524 = vmatpush1.bf16.msra.mxu0 %v405
  %525 = vmatprep.subr.bf16.mxu0 0
  %526 = vmatpush1.bf16.msra.mxu0 %v406
  %527 = vmatprep.subr.bf16.mxu0 0
  %528 = vmatpush1.bf16.msra.mxu0 %v407
  %529 = vmatprep.subr.bf16.mxu0 0
  %530 = vmatpush1.bf16.msra.mxu0 %v408
  %531 = vmatprep.subr.bf16.mxu0 0
  %532 = vmatpush1.bf16.msra.mxu0 %v409
  %533 = vmatprep.subr.bf16.mxu0 0
  %534 = vmatpush1.bf16.msra.mxu0 %v410
  %535 = vmatprep.subr.bf16.mxu0 0
  %536 = vmatpush1.bf16.msra.mxu0 %v411
  %537 = vmatprep.subr.bf16.mxu0 0
  %538 = vmatpush1.bf16.msra.mxu0 %v412
  %539 = vmatprep.subr.bf16.mxu0 0
  %540 = vmatpush1.bf16.msra.mxu0 %v413
  %541 = vmatprep.subr.bf16.mxu0 0
  %542 = vmatpush1.bf16.msra.mxu0 %v414
  %543 = vmatprep.mubr.bf16.mxu0 %v162
  %544 = vmatmul.mubr.bf16.gmra.mrb[0].mxu0 %v161
  %v545 = vpop.f32.mrb[0].mxu0
  %v546 = vadd.f32 %v148, %v545
  %v547 = vpop.f32.mrb[0].mxu0
  %v548 = vpop.f32.mrb[0].mxu0
  %v549 = vpop.f32.mrb[0].mxu0
  %550 = vdwg.mxu0
  %551 = vmatprep.subr.bf16.mxu0 0
  %552 = vmatpush1.bf16.msra.mxu0 %v415
  %553 = vmatprep.subr.bf16.mxu0 0
  %554 = vmatpush1.bf16.msra.mxu0 %v416
  %555 = vmatprep.subr.bf16.mxu0 0
  %556 = vmatpush1.bf16.msra.mxu0 %v417
  %557 = vmatprep.subr.bf16.mxu0 0
  %558 = vmatpush1.bf16.msra.mxu0 %v418
  %559 = vmatprep.subr.bf16.mxu0 0
  %560 = vmatpush1.bf16.msra.mxu0 %v419
  %561 = vmatprep.subr.bf16.mxu0 0
  %562 = vmatpush1.bf16.msra.mxu0 %v420
  %563 = vmatprep.subr.bf16.mxu0 0
  %564 = vmatpush1.bf16.msra.mxu0 %v421
  %565 = vmatprep.subr.bf16.mxu0 0
  %566 = vmatpush1.bf16.msra.mxu0 %v422
  %567 = vmatprep.subr.bf16.mxu0 0
  %568 = vmatpush1.bf16.msra.mxu0 %v423
  %569 = vmatprep.subr.bf16.mxu0 0
  %570 = vmatpush1.bf16.msra.mxu0 %v424
  %571 = vmatprep.subr.bf16.mxu0 0
  %572 = vmatpush1.bf16.msra.mxu0 %v425
  %573 = vmatprep.subr.bf16.mxu0 0
  %574 = vmatpush1.bf16.msra.mxu0 %v426
  %575 = vmatprep.subr.bf16.mxu0 0
  %576 = vmatpush1.bf16.msra.mxu0 %v427
  %577 = vmatprep.subr.bf16.mxu0 0
  %578 = vmatpush1.bf16.msra.mxu0 %v428
  %579 = vmatprep.subr.bf16.mxu0 0
  %580 = vmatpush1.bf16.msra.mxu0 %v429
  %581 = vmatprep.subr.bf16.mxu0 0
  %582 = vmatpush1.bf16.msra.mxu0 %v430
  %583 = vmatprep.mubr.bf16.mxu0 %v164
  %584 = vmatmul.mubr.bf16.gmra.mrb[0].mxu0 %v163
  %v585 = vpop.f32.mrb[0].mxu0
  %v586 = vadd.f32 %v546, %v585
  %v587 = vpop.f32.mrb[0].mxu0
  %v588 = vpop.f32.mrb[0].mxu0
  %v589 = vpop.f32.mrb[0].mxu0
  %590 = vdwg.mxu0
  %591 = vmatprep.subr.bf16.mxu0 0
  %592 = vmatpush1.bf16.msra.mxu0 %v431
  %593 = vmatprep.subr.bf16.mxu0 0
  %594 = vmatpush1.bf16.msra.mxu0 %v432
  %595 = vmatprep.subr.bf16.mxu0 0
  %596 = vmatpush1.bf16.msra.mxu0 %v433
  %597 = vmatprep.subr.bf16.mxu0 0
  %598 = vmatpush1.bf16.msra.mxu0 %v434
  %599 = vmatprep.subr.bf16.mxu0 0
  %600 = vmatpush1.bf16.msra.mxu0 %v435
  %601 = vmatprep.subr.bf16.mxu0 0
  %602 = vmatpush1.bf16.msra.mxu0 %v436
  %603 = vmatprep.subr.bf16.mxu0 0
  %604 = vmatpush1.bf16.msra.mxu0 %v437
  %605 = vmatprep.subr.bf16.mxu0 0
  %606 = vmatpush1.bf16.msra.mxu0 %v438
  %607 = vmatprep.subr.bf16.mxu0 0
  %608 = vmatpush1.bf16.msra.mxu0 %v439
  %609 = vmatprep.subr.bf16.mxu0 0
  %610 = vmatpush1.bf16.msra.mxu0 %v440
  %611 = vmatprep.subr.bf16.mxu0 0
  %612 = vmatpush1.bf16.msra.mxu0 %v441
  %613 = vmatprep.subr.bf16.mxu0 0
  %614 = vmatpush1.bf16.msra.mxu0 %v442
  %615 = vmatprep.subr.bf16.mxu0 0
  %616 = vmatpush1.bf16.msra.mxu0 %v443
  %617 = vmatprep.subr.bf16.mxu0 0
  %618 = vmatpush1.bf16.msra.mxu0 %v444
  %619 = vmatprep.subr.bf16.mxu0 0
  %620 = vmatpush1.bf16.msra.mxu0 %v445
  %621 = vmatprep.subr.bf16.mxu0 0
  %622 = vmatpush1.bf16.msra.mxu0 %v446
  %623 = vmatprep.mubr.bf16.mxu0 %v166
  %624 = vmatmul.mubr.bf16.gmra.mrb[0].mxu0 %v165
  %v625 = vpop.f32.mrb[0].mxu0
  %v626 = vadd.f32 %v586, %v625
  %v627 = vpop.f32.mrb[0].mxu0
  %v628 = vpop.f32.mrb[0].mxu0
  %v629 = vpop.f32.mrb[0].mxu0
  %630 = vdwg.mxu0
  %631 = vmatprep.subr.bf16.mxu0 0
  %632 = vmatpush1.bf16.msra.mxu0 %v447
  %633 = vmatprep.subr.bf16.mxu0 0
  %634 = vmatpush1.bf16.msra.mxu0 %v448
  %635 = vmatprep.subr.bf16.mxu0 0
  %636 = vmatpush1.bf16.msra.mxu0 %v449
  %637 = vmatprep.subr.bf16.mxu0 0
  %638 = vmatpush1.bf16.msra.mxu0 %v450
  %639 = vmatprep.subr.bf16.mxu0 0
  %640 = vmatpush1.bf16.msra.mxu0 %v451
  %641 = vmatprep.subr.bf16.mxu0 0
  %642 = vmatpush1.bf16.msra.mxu0 %v452
  %643 = vmatprep.subr.bf16.mxu0 0
  %644 = vmatpush1.bf16.msra.mxu0 %v453
  %645 = vmatprep.subr.bf16.mxu0 0
  %646 = vmatpush1.bf16.msra.mxu0 %v454
  %647 = vmatprep.subr.bf16.mxu0 0
  %648 = vmatpush1.bf16.msra.mxu0 0
  %649 = vmatprep.subr.bf16.mxu0 0
  %650 = vmatpush1.bf16.msra.mxu0 0
  %651 = vmatprep.subr.bf16.mxu0 0
  %652 = vmatpush1.bf16.msra.mxu0 0
  %653 = vmatprep.subr.bf16.mxu0 0
  %654 = vmatpush1.bf16.msra.mxu0 0
  %655 = vmatprep.subr.bf16.mxu0 0
  %656 = vmatpush1.bf16.msra.mxu0 0
  %657 = vmatprep.subr.bf16.mxu0 0
  %658 = vmatpush1.bf16.msra.mxu0 0
  %659 = vmatprep.subr.bf16.mxu0 0
  %660 = vmatpush1.bf16.msra.mxu0 0
  %661 = vmatprep.subr.bf16.mxu0 0
  %662 = vmatpush1.bf16.msra.mxu0 0
  %663 = vmatprep.mubr.bf16.mxu0 0
  %664 = vmatmul.mubr.bf16.gmra.mrb[0].mxu0 %v167
  %v665 = vpop.f32.mrb[0].mxu0
  %v666 = vadd.f32 %v626, %v665
  %v667 = vpop.f32.mrb[0].mxu0
  %v668 = vpop.f32.mrb[0].mxu0
  %v669 = vpop.f32.mrb[0].mxu0
  %670 = vdwg.mxu0
  %v671 = vmax.f32 %v666, 0.0
  %v672 = vpack.c.bf16 %v671, %v671
  %v673 = vld [vmem:[%s3] sm:$0xf]
  %v674 = vld [vmem:[%s3 + $0x4] sm:$0xf]
  %v675 = vld [vmem:[%s3 + $0x8] sm:$0xf]
  %v676 = vld [vmem:[%s3 + $0xc] sm:$0xf]
  %v677 = vld [vmem:[%s3 + $0x10] sm:$0xf]
  %v678 = vld [vmem:[%s3 + $0x14] sm:$0xf]
  %v679 = vld [vmem:[%s3 + $0x18] sm:$0xf]
  %v680 = vld [vmem:[%s3 + $0x1c] sm:$0xf]
  %v681 = vld [vmem:[%s3 + $0x20] sm:$0xf]
  %v682 = vld [vmem:[%s3 + $0x24] sm:$0xf]
  %v683 = vld [vmem:[%s3 + $0x28] sm:$0xf]
  %v684 = vld [vmem:[%s3 + $0x2c] sm:$0xf]
  %v685 = vld [vmem:[%s3 + $0x30] sm:$0xf]
  %v686 = vld [vmem:[%s3 + $0x34] sm:$0xf]
  %v687 = vld [vmem:[%s3 + $0x38] sm:$0xf]
  %v688 = vld [vmem:[%s3 + $0x3c] sm:$0xf]
  %v689 = vld [vmem:[%s4] sm:$0x1]
  %v691 = vlaneseq
  %v692 = vshrl.u32 %v691, 7
  %v693 = vsub.s32 0, %v692
  %v694 = vrot.slane %v689, %v693
  %v712 = vunpack.c.l.b16 %v673
  %v713 = vunpack.c.l.b16 %v674
  %v714 = vunpack.c.l.b16 %v675
  %v715 = vunpack.c.l.b16 %v676
  %v716 = vunpack.c.l.b16 %v677
  %v717 = vunpack.c.l.b16 %v678
  %v718 = vunpack.c.l.b16 %v679
  %v719 = vunpack.c.l.b16 %v680
  %v720 = vunpack.c.l.b16 %v681
  %v721 = vunpack.c.l.b16 %v682
  %v722 = vunpack.c.l.b16 %v683
  %v723 = vunpack.c.l.b16 %v684
  %v724 = vunpack.c.l.b16 %v685
  %v725 = vunpack.c.l.b16 %v686
  %v726 = vunpack.c.l.b16 %v687
  %v727 = vunpack.c.l.b16 %v688
  %v728 = vpack.c.b16 %v713, %v712
  %v729 = vpack.c.b16 %v715, %v714
  %v730 = vpack.c.b16 %v717, %v716
  %v731 = vpack.c.b16 %v719, %v718
  %v732 = vpack.c.b16 %v721, %v720
  %v733 = vpack.c.b16 %v723, %v722
  %v734 = vpack.c.b16 %v725, %v724
  %v735 = vpack.c.b16 %v727, %v726
  %744 = vmatprep.subr.bf16.mxu0 0
  %745 = vmatpush1.bf16.msra.mxu0 %v728
  %746 = vmatprep.subr.bf16.mxu0 0
  %747 = vmatpush1.bf16.msra.mxu0 %v729
  %748 = vmatprep.subr.bf16.mxu0 0
  %749 = vmatpush1.bf16.msra.mxu0 %v730
  %750 = vmatprep.subr.bf16.mxu0 0
  %751 = vmatpush1.bf16.msra.mxu0 %v731
  %752 = vmatprep.subr.bf16.mxu0 0
  %753 = vmatpush1.bf16.msra.mxu0 %v732
  %754 = vmatprep.subr.bf16.mxu0 0
  %755 = vmatpush1.bf16.msra.mxu0 %v733
  %756 = vmatprep.subr.bf16.mxu0 0
  %757 = vmatpush1.bf16.msra.mxu0 %v734
  %758 = vmatprep.subr.bf16.mxu0 0
  %759 = vmatpush1.bf16.msra.mxu0 %v735
  %760 = vmatprep.subr.bf16.mxu0 0
  %761 = vmatpush1.bf16.msra.mxu0 0
  %762 = vmatprep.subr.bf16.mxu0 0
  %763 = vmatpush1.bf16.msra.mxu0 0
  %764 = vmatprep.subr.bf16.mxu0 0
  %765 = vmatpush1.bf16.msra.mxu0 0
  %766 = vmatprep.subr.bf16.mxu0 0
  %767 = vmatpush1.bf16.msra.mxu0 0
  %768 = vmatprep.subr.bf16.mxu0 0
  %769 = vmatpush1.bf16.msra.mxu0 0
  %770 = vmatprep.subr.bf16.mxu0 0
  %771 = vmatpush1.bf16.msra.mxu0 0
  %772 = vmatprep.subr.bf16.mxu0 0
  %773 = vmatpush1.bf16.msra.mxu0 0
  %774 = vmatprep.subr.bf16.mxu0 0
  %775 = vmatpush1.bf16.msra.mxu0 0
  %776 = vmatprep.mubr.bf16.mxu0 0
  %777 = vmatmul.mubr.bf16.gmra.mrb[0].mxu0 %v672
  %v778 = vpop.f32.mrb[0].mxu0
  %v779 = vadd.f32 %v694, %v778
  %v780 = vpop.f32.mrb[0].mxu0
  %v781 = vpop.f32.mrb[0].mxu0
  %v782 = vpop.f32.mrb[0].mxu0
  %783 = vdwg.mxu0
  %v784 = vmax.f32 %v779, 0.0
  %v785 = vpack.c.bf16 %v784, %v784
  %v786 = vld [vmem:[%s5] sm:$0xf]
  %v787 = vld [vmem:[%s5 + $0x4] sm:$0xf]
  %v788 = vld [vmem:[%s5 + $0x8] sm:$0xf]
  %v789 = vld [vmem:[%s5 + $0xc] sm:$0xf]
  %v790 = vld [vmem:[%s5 + $0x10] sm:$0xf]
  %v791 = vld [vmem:[%s5 + $0x14] sm:$0xf]
  %v792 = vld [vmem:[%s5 + $0x18] sm:$0xf]
  %v793 = vld [vmem:[%s5 + $0x1c] sm:$0xf]
  %v794 = vld [vmem:[%s5 + $0x20] sm:$0xf]
  %v795 = vld [vmem:[%s5 + $0x24] sm:$0xf]
  %v796 = vld [vmem:[%s5 + $0x28] sm:$0xf]
  %v797 = vld [vmem:[%s5 + $0x2c] sm:$0xf]
  %v798 = vld [vmem:[%s5 + $0x30] sm:$0xf]
  %v799 = vld [vmem:[%s5 + $0x34] sm:$0xf]
  %v800 = vld [vmem:[%s5 + $0x38] sm:$0xf]
  %v801 = vld [vmem:[%s5 + $0x3c] sm:$0xf]
  %v802 = vld [vmem:[%s6] sm:$0x1]
  %v804 = vlaneseq
  %v805 = vshrl.u32 %v804, 7
  %v806 = vsub.s32 0, %v805
  %v807 = vrot.slane %v802, %v806
  %v825 = vunpack.c.l.b16 %v786
  %v826 = vunpack.c.l.b16 %v787
  %v827 = vunpack.c.l.b16 %v788
  %v828 = vunpack.c.l.b16 %v789
  %v829 = vunpack.c.l.b16 %v790
  %v830 = vunpack.c.l.b16 %v791
  %v831 = vunpack.c.l.b16 %v792
  %v832 = vunpack.c.l.b16 %v793
  %v833 = vunpack.c.l.b16 %v794
  %v834 = vunpack.c.l.b16 %v795
  %v835 = vunpack.c.l.b16 %v796
  %v836 = vunpack.c.l.b16 %v797
  %v837 = vunpack.c.l.b16 %v798
  %v838 = vunpack.c.l.b16 %v799
  %v839 = vunpack.c.l.b16 %v800
  %v840 = vunpack.c.l.b16 %v801
  %v841 = vpack.c.b16 %v826, %v825
  %v842 = vpack.c.b16 %v828, %v827
  %v843 = vpack.c.b16 %v830, %v829
  %v844 = vpack.c.b16 %v832, %v831
  %v845 = vpack.c.b16 %v834, %v833
  %v846 = vpack.c.b16 %v836, %v835
  %v847 = vpack.c.b16 %v838, %v837
  %v848 = vpack.c.b16 %v840, %v839
  %857 = vmatprep.subr.bf16.mxu0 0
  %858 = vmatpush1.bf16.msra.mxu0 %v841
  %859 = vmatprep.subr.bf16.mxu0 0
  %860 = vmatpush1.bf16.msra.mxu0 %v842
  %861 = vmatprep.subr.bf16.mxu0 0
  %862 = vmatpush1.bf16.msra.mxu0 %v843
  %863 = vmatprep.subr.bf16.mxu0 0
  %864 = vmatpush1.bf16.msra.mxu0 %v844
  %865 = vmatprep.subr.bf16.mxu0 0
  %866 = vmatpush1.bf16.msra.mxu0 %v845
  %867 = vmatprep.subr.bf16.mxu0 0
  %868 = vmatpush1.bf16.msra.mxu0 %v846
  %869 = vmatprep.subr.bf16.mxu0 0
  %870 = vmatpush1.bf16.msra.mxu0 %v847
  %871 = vmatprep.subr.bf16.mxu0 0
  %872 = vmatpush1.bf16.msra.mxu0 %v848
  %873 = vmatprep.subr.bf16.mxu0 0
  %874 = vmatpush1.bf16.msra.mxu0 0
  %875 = vmatprep.subr.bf16.mxu0 0
  %876 = vmatpush1.bf16.msra.mxu0 0
  %877 = vmatprep.subr.bf16.mxu0 0
  %878 = vmatpush1.bf16.msra.mxu0 0
  %879 = vmatprep.subr.bf16.mxu0 0
  %880 = vmatpush1.bf16.msra.mxu0 0
  %881 = vmatprep.subr.bf16.mxu0 0
  %882 = vmatpush1.bf16.msra.mxu0 0
  %883 = vmatprep.subr.bf16.mxu0 0
  %884 = vmatpush1.bf16.msra.mxu0 0
  %885 = vmatprep.subr.bf16.mxu0 0
  %886 = vmatpush1.bf16.msra.mxu0 0
  %887 = vmatprep.subr.bf16.mxu0 0
  %888 = vmatpush1.bf16.msra.mxu0 0
  %889 = vmatprep.mubr.bf16.mxu0 0
  %890 = vmatmul.mubr.bf16.gmra.mrb[0].mxu0 %v785
  %v891 = vpop.f32.mrb[0].mxu0
  %v892 = vadd.f32 %v807, %v891
  %v893 = vpop.f32.mrb[0].mxu0
  %v894 = vpop.f32.mrb[0].mxu0
  %v895 = vpop.f32.mrb[0].mxu0
  %896 = vdwg.mxu0
  %897 = vmax.xlane.f32.xlu0 %v892
  %v898 = vpop.xlane.xlu0 %897
  %v899 = vsub.f32 %v892, %v898
  %v900 = vmul.f32 %v899, 1.442695
  %v901 = vpow.pop %v900
  %902 = vadd.xlane.f32.xlu0 %v901
  %v903 = vpop.xlane.xlu0 %902
  %v904 = vlog2.pop %v903
  %v905 = vmul.f32 %v904, 0.6931472
  %v906 = vadd.f32 %v898, %v905
  %v907 = vsub.f32 %v892, %v906
  %908 = vst [vmem:[%s7] sm:$0xff] %v907
  // Predicated region
  $region30: #{_mlp_forward_jit.1} parent=0 // pred_check
    _
  $region31: #{_mlp_forward_jit.1} parent=0 // pred_check_branch
    %910 = sbr.rel (0) target = $region33
  $region32: #{_mlp_forward_jit.1} parent=0 // pred_region
    _
  $region33: #{_mlp_forward_jit.1} parent=0 // pred_fallthru
    _
  // Predicated region
  $region34: #{_mlp_forward_jit.1} parent=0 // pred_check
    _
  $region35: #{_mlp_forward_jit.1} parent=0 // pred_check_branch
    %912 = sbr.rel (0) target = $region37
  $region36: #{_mlp_forward_jit.1} parent=0 // pred_region
    _
  $region37: #{_mlp_forward_jit.1} parent=0 // pred_fallthru
    _

// kernel: _mlp_forward_jit.1
$region0: #{_mlp_forward_jit.1}
  #allocation0 [shape = 'u32[]', space=smem, size = 0x4, offset = 0x4, fixed_abs, tag = 'smem constant byte address 0x4 - core index']
  #allocation1 [shape = 'u32[144,128]{1,0:T(1,128)}', space=vmem, size = 0x12000, scoped, tag = 'internal scratch']
  %s0 = inlined_call_operand.vmem [shape: bf16[8,896], index: 0, kind: input, shape index: {}]
  %s1 = inlined_call_operand.vmem [shape: bf16[896,128], index: 1, kind: input, shape index: {}]
  %s2 = inlined_call_operand.vmem [shape: f32[1,128], index: 2, kind: input, shape index: {}]
  %s3 = inlined_call_operand.vmem [shape: bf16[128,128], index: 3, kind: input, shape index: {}]
  %s4 = inlined_call_operand.vmem [shape: f32[1,128], index: 4, kind: input, shape index: {}]
  %s5 = inlined_call_operand.vmem [shape: bf16[128,128], index: 5, kind: input, shape index: {}]
  %s6 = inlined_call_operand.vmem [shape: f32[1,128], index: 6, kind: input, shape index: {}]
  %s7 = inlined_call_operand.vmem [shape: f32[8,128], index: 7, kind: output, shape index: {}]
  %s8 = sld [smem:[#allocation0]]
  $region38: #{_mlp_forward_jit.1} parent=0
    _
  %s10 = ssub.s32 1, %s8
  %s11 = scalar_select 0, %s10, %s8
  // Predicated region
  $region2: #{_mlp_forward_jit.1} parent=0 // pred_check
    _
  $region3: #{_mlp_forward_jit.1} parent=0 // pred_check_branch
    %13 = sbr.rel (0) target = $region5
  $region4: #{_mlp_forward_jit.1} parent=0 // pred_region
    _
  $region5: #{_mlp_forward_jit.1} parent=0 // pred_fallthru
    _
  // Predicated region
  $region6: #{_mlp_forward_jit.1} parent=0 // pred_check
    _
  $region7: #{_mlp_forward_jit.1} parent=0 // pred_check_branch
    %15 = sbr.rel (0) target = $region9
  $region8: #{_mlp_forward_jit.1} parent=0 // pred_region
    _
  $region9: #{_mlp_forward_jit.1} parent=0 // pred_fallthru
    _
  // Predicated region
  $region10: #{_mlp_forward_jit.1} parent=0 // pred_check
    _
  $region11: #{_mlp_forward_jit.1} parent=0 // pred_check_branch
    %17 = sbr.rel (0) target = $region13
  $region12: #{_mlp_forward_jit.1} parent=0 // pred_region
    _
  $region13: #{_mlp_forward_jit.1} parent=0 // pred_fallthru
    _
  // Predicated region
  $region14: #{_mlp_forward_jit.1} parent=0 // pred_check
    _
  $region15: #{_mlp_forward_jit.1} parent=0 // pred_check_branch
    %19 = sbr.rel (0) target = $region17
  $region16: #{_mlp_forward_jit.1} parent=0 // pred_region
    _
  $region17: #{_mlp_forward_jit.1} parent=0 // pred_fallthru
    _
  // Predicated region
  $region18: #{_mlp_forward_jit.1} parent=0 // pred_check
    _
  $region19: #{_mlp_forward_jit.1} parent=0 // pred_check_branch
    %21 = sbr.rel (0) target = $region21
  $region20: #{_mlp_forward_jit.1} parent=0 // pred_region
    _
  $region21: #{_mlp_forward_jit.1} parent=0 // pred_fallthru
    _
  // Predicated region
  $region22: #{_mlp_forward_jit.1} parent=0 // pred_check
    _
  $region23: #{_mlp_forward_jit.1} parent=0 // pred_check_branch
    %23 = sbr.rel (0) target = $region25
  $region24: #{_mlp_forward_jit.1} parent=0 // pred_region
    _
  $region25: #{_mlp_forward_jit.1} parent=0 // pred_fallthru
    _
  // Predicated region
  $region26: #{_mlp_forward_jit.1} parent=0 // pred_check
    _
  $region27: #{_mlp_forward_jit.1} parent=0 // pred_check_branch
    %25 = sbr.rel (0) target = $region29
  $region28: #{_mlp_forward_jit.1} parent=0 // pred_region
    _
  $region29: #{_mlp_forward_jit.1} parent=0 // pred_fallthru
    _
  %v27 = vld [vmem:[%s0] sm:$0xff]
  %v28 = vld [vmem:[%s0 + $0x8] sm:$0xff]
  %v29 = vld [vmem:[%s0 + $0x10] sm:$0xff]
  %v30 = vld [vmem:[%s0 + $0x18] sm:$0xf]
  %v31 = vld [vmem:[%s1] sm:$0xf]
  %v32 = vld [vmem:[%s1 + $0x4] sm:$0xf]
  %v33 = vld [vmem:[%s1 + $0x8] sm:$0xf]
  %v34 = vld [vmem:[%s1 + $0xc] sm:$0xf]
  %v35 = vld [vmem:[%s1 + $0x10] sm:$0xf]
  %v36 = vld [vmem:[%s1 + $0x14] sm:$0xf]
  %v37 = vld [vmem:[%s1 + $0x18] sm:$0xf]
  %v38 = vld [vmem:[%s1 + $0x1c] sm:$0xf]
  %v39 = vld [vmem:[%s1 + $0x20] sm:$0xf]
  %v40 = vld [vmem:[%s1 + $0x24] sm:$0xf]
  %v41 = vld [vmem:[%s1 + $0x28] sm:$0xf]
  %v42 = vld [vmem:[%s1 + $0x2c] sm:$0xf]
  %v43 = vld [vmem:[%s1 + $0x30] sm:$0xf]
  %v44 = vld [vmem:[%s1 + $0x34] sm:$0xf]
  %v45 = vld [vmem:[%s1 + $0x38] sm:$0xf]
  %v46 = vld [vmem:[%s1 + $0x3c] sm:$0xf]
  %v47 = vld [vmem:[%s1 + $0x40] sm:$0xf]
  %v48 = vld [vmem:[%s1 + $0x44] sm:$0xf]
  %v49 = vld [vmem:[%s1 + $0x48] sm:$0xf]
  %v50 = vld [vmem:[%s1 + $0x4c] sm:$0xf]
  %v51 = vld [vmem:[%s1 + $0x50] sm:$0xf]
  %v52 = vld [vmem:[%s1 + $0x54] sm:$0xf]
  %v53 = vld [vmem:[%s1 + $0x58] sm:$0xf]
  %v54 = vld [vmem:[%s1 + $0x5c] sm:$0xf]
  %v55 = vld [vmem:[%s1 + $0x60] sm:$0xf]
  %v56 = vld [vmem:[%s1 + $0x64] sm:$0xf]
  %v57 = vld [vmem:[%s1 + $0x68] sm:$0xf]
  %v58 = vld [vmem:[%s1 + $0x6c] sm:$0xf]
  %v59 = vld [vmem:[%s1 + $0x70] sm:$0xf]
  %v60 = vld [vmem:[%s1 + $0x74] sm:$0xf]
  %v61 = vld [vmem:[%s1 + $0x78] sm:$0xf]
  %v62 = vld [vmem:[%s1 + $0x7c] sm:$0xf]
  %v63 = vld [vmem:[%s1 + $0x80] sm:$0xf]
  %v64 = vld [vmem:[%s1 + $0x84] sm:$0xf]
  %v65 = vld [vmem:[%s1 + $0x88] sm:$0xf]
  %v66 = vld [vmem:[%s1 + $0x8c] sm:$0xf]
  %v67 = vld [vmem:[%s1 + $0x90] sm:$0xf]
  %v68 = vld [vmem:[%s1 + $0x94] sm:$0xf]
  %v69 = vld [vmem:[%s1 + $0x98] sm:$0xf]
  %v70 = vld [vmem:[%s1 + $0x9c] sm:$0xf]
  %v71 = vld [vmem:[%s1 + $0xa0] sm:$0xf]
  %v72 = vld [vmem:[%s1 + $0xa4] sm:$0xf]
  %v73 = vld [vmem:[%s1 + $0xa8] sm:$0xf]
  %v74 = vld [vmem:[%s1 + $0xac] sm:$0xf]
  %v75 = vld [vmem:[%s1 + $0xb0] sm:$0xf]
  %v76 = vld [vmem:[%s1 + $0xb4] sm:$0xf]
  %v77 = vld [vmem:[%s1 + $0xb8] sm:$0xf]
  %v78 = vld [vmem:[%s1 + $0xbc] sm:$0xf]
  %v79 = vld [vmem:[%s1 + $0xc0] sm:$0xf]
  %v80 = vld [vmem:[%s1 + $0xc4] sm:$0xf]
  %v81 = vld [vmem:[%s1 + $0xc8] sm:$0xf]
  %v82 = vld [vmem:[%s1 + $0xcc] sm:$0xf]
  %v83 = vld [vmem:[%s1 + $0xd0] sm:$0xf]
  %v84 = vld [vmem:[%s1 + $0xd4] sm:$0xf]
  %v85 = vld [vmem:[%s1 + $0xd8] sm:$0xf]
  %v86 = vld [vmem:[%s1 + $0xdc] sm:$0xf]
  %v87 = vld [vmem:[%s1 + $0xe0] sm:$0xf]
  %v88 = vld [vmem:[%s1 + $0xe4] sm:$0xf]
  %v89 = vld [vmem:[%s1 + $0xe8] sm:$0xf]
  %v90 = vld [vmem:[%s1 + $0xec] sm:$0xf]
  %v91 = vld [vmem:[%s1 + $0xf0] sm:$0xf]
  %v92 = vld [vmem:[%s1 + $0xf4] sm:$0xf]
  %v93 = vld [vmem:[%s1 + $0xf8] sm:$0xf]
  %v94 = vld [vmem:[%s1 + $0xfc] sm:$0xf]
  %v95 = vld [vmem:[%s1 + $0x100] sm:$0xf]
  %v96 = vld [vmem:[%s1 + $0x104] sm:$0xf]
  %v97 = vld [vmem:[%s1 + $0x108] sm:$0xf]
  %v98 = vld [vmem:[%s1 + $0x10c] sm:$0xf]
  %v99 = vld [vmem:[%s1 + $0x110] sm:$0xf]
  %v100 = vld [vmem:[%s1 + $0x114] sm:$0xf]
  %v101 = vld [vmem:[%s1 + $0x118] sm:$0xf]
  %v102 = vld [vmem:[%s1 + $0x11c] sm:$0xf]
  %v103 = vld [vmem:[%s1 + $0x120] sm:$0xf]
  %v104 = vld [vmem:[%s1 + $0x124] sm:$0xf]
  %v105 = vld [vmem:[%s1 + $0x128] sm:$0xf]
  %v106 = vld [vmem:[%s1 + $0x12c] sm:$0xf]
  %v107 = vld [vmem:[%s1 + $0x130] sm:$0xf]
  %v108 = vld [vmem:[%s1 + $0x134] sm:$0xf]
  %v109 = vld [vmem:[%s1 + $0x138] sm:$0xf]
  %v110 = vld [vmem:[%s1 + $0x13c] sm:$0xf]
  %v111 = vld [vmem:[%s1 + $0x140] sm:$0xf]
  %v112 = vld [vmem:[%s1 + $0x144] sm:$0xf]
  %v113 = vld [vmem:[%s1 + $0x148] sm:$0xf]
  %v114 = vld [vmem:[%s1 + $0x14c] sm:$0xf]
  %v115 = vld [vmem:[%s1 + $0x150] sm:$0xf]
  %v116 = vld [vmem:[%s1 + $0x154] sm:$0xf]
  %v117 = vld [vmem:[%s1 + $0x158] sm:$0xf]
  %v118 = vld [vmem:[%s1 + $0x15c] sm:$0xf]
  %v119 = vld [vmem:[%s1 + $0x160] sm:$0xf]
  %v120 = vld [vmem:[%s1 + $0x164] sm:$0xf]
  %v121 = vld [vmem:[%s1 + $0x168] sm:$0xf]
  %v122 = vld [vmem:[%s1 + $0x16c] sm:$0xf]
  %v123 = vld [vmem:[%s1 + $0x170] sm:$0xf]
  %v124 = vld [vmem:[%s1 + $0x174] sm:$0xf]
  %v125 = vld [vmem:[%s1 + $0x178] sm:$0xf]
  %v126 = vld [vmem:[%s1 + $0x17c] sm:$0xf]
  %v127 = vld [vmem:[%s1 + $0x180] sm:$0xf]
  %v128 = vld [vmem:[%s1 + $0x184] sm:$0xf]
  %v129 = vld [vmem:[%s1 + $0x188] sm:$0xf]
  %v130 = vld [vmem:[%s1 + $0x18c] sm:$0xf]
  %v131 = vld [vmem:[%s1 + $0x190] sm:$0xf]
  %v132 = vld [vmem:[%s1 + $0x194] sm:$0xf]
  %v133 = vld [vmem:[%s1 + $0x198] sm:$0xf]
  %v134 = vld [vmem:[%s1 + $0x19c] sm:$0xf]
  %v135 = vld [vmem:[%s1 + $0x1a0] sm:$0xf]
  %v136 = vld [vmem:[%s1 + $0x1a4] sm:$0xf]
  %v137 = vld [vmem:[%s1 + $0x1a8] sm:$0xf]
  %v138 = vld [vmem:[%s1 + $0x1ac] sm:$0xf]
  %v139 = vld [vmem:[%s1 + $0x1b0] sm:$0xf]
  %v140 = vld [vmem:[%s1 + $0x1b4] sm:$0xf]
  %v141 = vld [vmem:[%s1 + $0x1b8] sm:$0xf]
  %v142 = vld [vmem:[%s1 + $0x1bc] sm:$0xf]
  %v143 = vld [vmem:[%s2] sm:$0x1]
  %v145 = vlaneseq
  %v146 = vshrl.u32 %v145, 7
  %v147 = vsub.s32 0, %v146
  %v148 = vrot.slane %v143, %v147
  %v154 = vunpack.c.l.b16 %v27
  %v155 = vunpack.c.h.b16 %v27
  %v156 = vunpack.c.l.b16 %v28
  %v157 = vunpack.c.h.b16 %v28
  %v158 = vunpack.c.l.b16 %v29
  %v159 = vunpack.c.h.b16 %v29
  %v160 = vunpack.c.l.b16 %v30
  %v161 = vpack.c.b16 %v154, %v154
  %v162 = vpack.c.b16 %v155, %v155
  %v163 = vpack.c.b16 %v156, %v156
  %v164 = vpack.c.b16 %v157, %v157
  %v165 = vpack.c.b16 %v158, %v158
  %v166 = vpack.c.b16 %v159, %v159
  %v167 = vpack.c.b16 %v160, %v160
  %v287 = vunpack.c.l.b16 %v31
  %v288 = vunpack.c.l.b16 %v32
  %v289 = vunpack.c.l.b16 %v33
  %v290 = vunpack.c.l.b16 %v34
  %v291 = vunpack.c.l.b16 %v35
  %v292 = vunpack.c.l.b16 %v36
  %v293 = vunpack.c.l.b16 %v37
  %v294 = vunpack.c.l.b16 %v38
  %v295 = vunpack.c.l.b16 %v39
  %v296 = vunpack.c.l.b16 %v40
  %v297 = vunpack.c.l.b16 %v41
  %v298 = vunpack.c.l.b16 %v42
  %v299 = vunpack.c.l.b16 %v43
  %v300 = vunpack.c.l.b16 %v44
  %v301 = vunpack.c.l.b16 %v45
  %v302 = vunpack.c.l.b16 %v46
  %v303 = vunpack.c.l.b16 %v47
  %v304 = vunpack.c.l.b16 %v48
  %v305 = vunpack.c.l.b16 %v49
  %v306 = vunpack.c.l.b16 %v50
  %v307 = vunpack.c.l.b16 %v51
  %v308 = vunpack.c.l.b16 %v52
  %v309 = vunpack.c.l.b16 %v53
  %v310 = vunpack.c.l.b16 %v54
  %v311 = vunpack.c.l.b16 %v55
  %v312 = vunpack.c.l.b16 %v56
  %v313 = vunpack.c.l.b16 %v57
  %v314 = vunpack.c.l.b16 %v58
  %v315 = vunpack.c.l.b16 %v59
  %v316 = vunpack.c.l.b16 %v60
  %v317 = vunpack.c.l.b16 %v61
  %v318 = vunpack.c.l.b16 %v62
  %v319 = vunpack.c.l.b16 %v63
  %v320 = vunpack.c.l.b16 %v64
  %v321 = vunpack.c.l.b16 %v65
  %v322 = vunpack.c.l.b16 %v66
  %v323 = vunpack.c.l.b16 %v67
  %v324 = vunpack.c.l.b16 %v68
  %v325 = vunpack.c.l.b16 %v69
  %v326 = vunpack.c.l.b16 %v70
  %v327 = vunpack.c.l.b16 %v71
  %v328 = vunpack.c.l.b16 %v72
  %v329 = vunpack.c.l.b16 %v73
  %v330 = vunpack.c.l.b16 %v74
  %v331 = vunpack.c.l.b16 %v75
  %v332 = vunpack.c.l.b16 %v76
  %v333 = vunpack.c.l.b16 %v77
  %v334 = vunpack.c.l.b16 %v78
  %v335 = vunpack.c.l.b16 %v79
  %v336 = vunpack.c.l.b16 %v80
  %v337 = vunpack.c.l.b16 %v81
  %v338 = vunpack.c.l.b16 %v82
  %v339 = vunpack.c.l.b16 %v83
  %v340 = vunpack.c.l.b16 %v84
  %v341 = vunpack.c.l.b16 %v85
  %v342 = vunpack.c.l.b16 %v86
  %v343 = vunpack.c.l.b16 %v87
  %v344 = vunpack.c.l.b16 %v88
  %v345 = vunpack.c.l.b16 %v89
  %v346 = vunpack.c.l.b16 %v90
  %v347 = vunpack.c.l.b16 %v91
  %v348 = vunpack.c.l.b16 %v92
  %v349 = vunpack.c.l.b16 %v93
  %v350 = vunpack.c.l.b16 %v94
  %v351 = vunpack.c.l.b16 %v95
  %v352 = vunpack.c.l.b16 %v96
  %v353 = vunpack.c.l.b16 %v97
  %v354 = vunpack.c.l.b16 %v98
  %v355 = vunpack.c.l.b16 %v99
  %v356 = vunpack.c.l.b16 %v100
  %v357 = vunpack.c.l.b16 %v101
  %v358 = vunpack.c.l.b16 %v102
  %v359 = vunpack.c.l.b16 %v103
  %v360 = vunpack.c.l.b16 %v104
  %v361 = vunpack.c.l.b16 %v105
  %v362 = vunpack.c.l.b16 %v106
  %v363 = vunpack.c.l.b16 %v107
  %v364 = vunpack.c.l.b16 %v108
  %v365 = vunpack.c.l.b16 %v109
  %v366 = vunpack.c.l.b16 %v110
  %v367 = vunpack.c.l.b16 %v111
  %v368 = vunpack.c.l.b16 %v112
  %v369 = vunpack.c.l.b16 %v113
  %v370 = vunpack.c.l.b16 %v114
  %v371 = vunpack.c.l.b16 %v115
  %v372 = vunpack.c.l.b16 %v116
  %v373 = vunpack.c.l.b16 %v117
  %v374 = vunpack.c.l.b16 %v118
  %v375 = vunpack.c.l.b16 %v119
  %v376 = vunpack.c.l.b16 %v120
  %v377 = vunpack.c.l.b16 %v121
  %v378 = vunpack.c.l.b16 %v122
  %v379 = vunpack.c.l.b16 %v123
  %v380 = vunpack.c.l.b16 %v124
  %v381 = vunpack.c.l.b16 %v125
  %v382 = vunpack.c.l.b16 %v126
  %v383 = vunpack.c.l.b16 %v127
  %v384 = vunpack.c.l.b16 %v128
  %v385 = vunpack.c.l.b16 %v129
  %v386 = vunpack.c.l.b16 %v130
  %v387 = vunpack.c.l.b16 %v131
  %v388 = vunpack.c.l.b16 %v132
  %v389 = vunpack.c.l.b16 %v133
  %v390 = vunpack.c.l.b16 %v134
  %v391 = vunpack.c.l.b16 %v135
  %v392 = vunpack.c.l.b16 %v136
  %v393 = vunpack.c.l.b16 %v137
  %v394 = vunpack.c.l.b16 %v138
  %v395 = vunpack.c.l.b16 %v139
  %v396 = vunpack.c.l.b16 %v140
  %v397 = vunpack.c.l.b16 %v141
  %v398 = vunpack.c.l.b16 %v142
  %v399 = vpack.c.b16 %v288, %v287
  %v400 = vpack.c.b16 %v290, %v289
  %v401 = vpack.c.b16 %v292, %v291
  %v402 = vpack.c.b16 %v294, %v293
  %v403 = vpack.c.b16 %v296, %v295
  %v404 = vpack.c.b16 %v298, %v297
  %v405 = vpack.c.b16 %v300, %v299
  %v406 = vpack.c.b16 %v302, %v301
  %v407 = vpack.c.b16 %v304, %v303
  %v408 = vpack.c.b16 %v306, %v305
  %v409 = vpack.c.b16 %v308, %v307
  %v410 = vpack.c.b16 %v310, %v309
  %v411 = vpack.c.b16 %v312, %v311
  %v412 = vpack.c.b16 %v314, %v313
  %v413 = vpack.c.b16 %v316, %v315
  %v414 = vpack.c.b16 %v318, %v317
  %v415 = vpack.c.b16 %v320, %v319
  %v416 = vpack.c.b16 %v322, %v321
  %v417 = vpack.c.b16 %v324, %v323
  %v418 = vpack.c.b16 %v326, %v325
  %v419 = vpack.c.b16 %v328, %v327
  %v420 = vpack.c.b16 %v330, %v329
  %v421 = vpack.c.b16 %v332, %v331
  %v422 = vpack.c.b16 %v334, %v333
  %v423 = vpack.c.b16 %v336, %v335
  %v424 = vpack.c.b16 %v338, %v337
  %v425 = vpack.c.b16 %v340, %v339
  %v426 = vpack.c.b16 %v342, %v341
  %v427 = vpack.c.b16 %v344, %v343
  %v428 = vpack.c.b16 %v346, %v345
  %v429 = vpack.c.b16 %v348, %v347
  %v430 = vpack.c.b16 %v350, %v349
  %v431 = vpack.c.b16 %v352, %v351
  %v432 = vpack.c.b16 %v354, %v353
  %v433 = vpack.c.b16 %v356, %v355
  %v434 = vpack.c.b16 %v358, %v357
  %v435 = vpack.c.b16 %v360, %v359
  %v436 = vpack.c.b16 %v362, %v361
  %v437 = vpack.c.b16 %v364, %v363
  %v438 = vpack.c.b16 %v366, %v365
  %v439 = vpack.c.b16 %v368, %v367
  %v440 = vpack.c.b16 %v370, %v369
  %v441 = vpack.c.b16 %v372, %v371
  %v442 = vpack.c.b16 %v374, %v373
  %v443 = vpack.c.b16 %v376, %v375
  %v444 = vpack.c.b16 %v378, %v377
  %v445 = vpack.c.b16 %v380, %v379
  %v446 = vpack.c.b16 %v382, %v381
  %v447 = vpack.c.b16 %v384, %v383
  %v448 = vpack.c.b16 %v386, %v385
  %v449 = vpack.c.b16 %v388, %v387
  %v450 = vpack.c.b16 %v390, %v389
  %v451 = vpack.c.b16 %v392, %v391
  %v452 = vpack.c.b16 %v394, %v393
  %v453 = vpack.c.b16 %v396, %v395
  %v454 = vpack.c.b16 %v398, %v397
  %511 = vmatprep.subr.bf16.mxu0 0
  %512 = vmatpush1.bf16.msra.mxu0 %v399
  %513 = vmatprep.subr.bf16.mxu0 0
  %514 = vmatpush1.bf16.msra.mxu0 %v400
  %515 = vmatprep.subr.bf16.mxu0 0
  %516 = vmatpush1.bf16.msra.mxu0 %v401
  %517 = vmatprep.subr.bf16.mxu0 0
  %518 = vmatpush1.bf16.msra.mxu0 %v402
  %519 = vmatprep.subr.bf16.mxu0 0
  %520 = vmatpush1.bf16.msra.mxu0 %v403
  %521 = vmatprep.subr.bf16.mxu0 0
  %522 = vmatpush1.bf16.msra.mxu0 %v404
  %523 = vmatprep.subr.bf16.mxu0 0
  %524 = vmatpush1.bf16.msra.mxu0 %v405
  %525 = vmatprep.subr.bf16.mxu0 0
  %526 = vmatpush1.bf16.msra.mxu0 %v406
  %527 = vmatprep.subr.bf16.mxu0 0
  %528 = vmatpush1.bf16.msra.mxu0 %v407
  %529 = vmatprep.subr.bf16.mxu0 0
  %530 = vmatpush1.bf16.msra.mxu0 %v408
  %531 = vmatprep.subr.bf16.mxu0 0
  %532 = vmatpush1.bf16.msra.mxu0 %v409
  %533 = vmatprep.subr.bf16.mxu0 0
  %534 = vmatpush1.bf16.msra.mxu0 %v410
  %535 = vmatprep.subr.bf16.mxu0 0
  %536 = vmatpush1.bf16.msra.mxu0 %v411
  %537 = vmatprep.subr.bf16.mxu0 0
  %538 = vmatpush1.bf16.msra.mxu0 %v412
  %539 = vmatprep.subr.bf16.mxu0 0
  %540 = vmatpush1.bf16.msra.mxu0 %v413
  %541 = vmatprep.subr.bf16.mxu0 0
  %542 = vmatpush1.bf16.msra.mxu0 %v414
  %543 = vmatprep.mubr.bf16.mxu0 %v162
  %544 = vmatmul.mubr.bf16.gmra.mrb[0].mxu0 %v161
  %v545 = vpop.f32.mrb[0].mxu0
  %v546 = vadd.f32 %v148, %v545
  %v547 = vpop.f32.mrb[0].mxu0
  %v548 = vpop.f32.mrb[0].mxu0
  %v549 = vpop.f32.mrb[0].mxu0
  %550 = vdwg.mxu0
  %551 = vmatprep.subr.bf16.mxu0 0
  %552 = vmatpush1.bf16.msra.mxu0 %v415
  %553 = vmatprep.subr.bf16.mxu0 0
  %554 = vmatpush1.bf16.msra.mxu0 %v416
  %555 = vmatprep.subr.bf16.mxu0 0
  %556 = vmatpush1.bf16.msra.mxu0 %v417
  %557 = vmatprep.subr.bf16.mxu0 0
  %558 = vmatpush1.bf16.msra.mxu0 %v418
  %559 = vmatprep.subr.bf16.mxu0 0
  %560 = vmatpush1.bf16.msra.mxu0 %v419
  %561 = vmatprep.subr.bf16.mxu0 0
  %562 = vmatpush1.bf16.msra.mxu0 %v420
  %563 = vmatprep.subr.bf16.mxu0 0
  %564 = vmatpush1.bf16.msra.mxu0 %v421
  %565 = vmatprep.subr.bf16.mxu0 0
  %566 = vmatpush1.bf16.msra.mxu0 %v422
  %567 = vmatprep.subr.bf16.mxu0 0
  %568 = vmatpush1.bf16.msra.mxu0 %v423
  %569 = vmatprep.subr.bf16.mxu0 0
  %570 = vmatpush1.bf16.msra.mxu0 %v424
  %571 = vmatprep.subr.bf16.mxu0 0
  %572 = vmatpush1.bf16.msra.mxu0 %v425
  %573 = vmatprep.subr.bf16.mxu0 0
  %574 = vmatpush1.bf16.msra.mxu0 %v426
  %575 = vmatprep.subr.bf16.mxu0 0
  %576 = vmatpush1.bf16.msra.mxu0 %v427
  %577 = vmatprep.subr.bf16.mxu0 0
  %578 = vmatpush1.bf16.msra.mxu0 %v428
  %579 = vmatprep.subr.bf16.mxu0 0
  %580 = vmatpush1.bf16.msra.mxu0 %v429
  %581 = vmatprep.subr.bf16.mxu0 0
  %582 = vmatpush1.bf16.msra.mxu0 %v430
  %583 = vmatprep.mubr.bf16.mxu0 %v164
  %584 = vmatmul.mubr.bf16.gmra.mrb[0].mxu0 %v163
  %v585 = vpop.f32.mrb[0].mxu0
  %v586 = vadd.f32 %v546, %v585
  %v587 = vpop.f32.mrb[0].mxu0
  %v588 = vpop.f32.mrb[0].mxu0
  %v589 = vpop.f32.mrb[0].mxu0
  %590 = vdwg.mxu0
  %591 = vmatprep.subr.bf16.mxu0 0
  %592 = vmatpush1.bf16.msra.mxu0 %v431
  %593 = vmatprep.subr.bf16.mxu0 0
  %594 = vmatpush1.bf16.msra.mxu0 %v432
  %595 = vmatprep.subr.bf16.mxu0 0
  %596 = vmatpush1.bf16.msra.mxu0 %v433
  %597 = vmatprep.subr.bf16.mxu0 0
  %598 = vmatpush1.bf16.msra.mxu0 %v434
  %599 = vmatprep.subr.bf16.mxu0 0
  %600 = vmatpush1.bf16.msra.mxu0 %v435
  %601 = vmatprep.subr.bf16.mxu0 0
  %602 = vmatpush1.bf16.msra.mxu0 %v436
  %603 = vmatprep.subr.bf16.mxu0 0
  %604 = vmatpush1.bf16.msra.mxu0 %v437
  %605 = vmatprep.subr.bf16.mxu0 0
  %606 = vmatpush1.bf16.msra.mxu0 %v438
  %607 = vmatprep.subr.bf16.mxu0 0
  %608 = vmatpush1.bf16.msra.mxu0 %v439
  %609 = vmatprep.subr.bf16.mxu0 0
  %610 = vmatpush1.bf16.msra.mxu0 %v440
  %611 = vmatprep.subr.bf16.mxu0 0
  %612 = vmatpush1.bf16.msra.mxu0 %v441
  %613 = vmatprep.subr.bf16.mxu0 0
  %614 = vmatpush1.bf16.msra.mxu0 %v442
  %615 = vmatprep.subr.bf16.mxu0 0
  %616 = vmatpush1.bf16.msra.mxu0 %v443
  %617 = vmatprep.subr.bf16.mxu0 0
  %618 = vmatpush1.bf16.msra.mxu0 %v444
  %619 = vmatprep.subr.bf16.mxu0 0
  %620 = vmatpush1.bf16.msra.mxu0 %v445
  %621 = vmatprep.subr.bf16.mxu0 0
  %622 = vmatpush1.bf16.msra.mxu0 %v446
  %623 = vmatprep.mubr.bf16.mxu0 %v166
  %624 = vmatmul.mubr.bf16.gmra.mrb[0].mxu0 %v165
  %v625 = vpop.f32.mrb[0].mxu0
  %v626 = vadd.f32 %v586, %v625
  %v627 = vpop.f32.mrb[0].mxu0
  %v628 = vpop.f32.mrb[0].mxu0
  %v629 = vpop.f32.mrb[0].mxu0
  %630 = vdwg.mxu0
  %631 = vmatprep.subr.bf16.mxu0 0
  %632 = vmatpush1.bf16.msra.mxu0 %v447
  %633 = vmatprep.subr.bf16.mxu0 0
  %634 = vmatpush1.bf16.msra.mxu0 %v448
  %635 = vmatprep.subr.bf16.mxu0 0
  %636 = vmatpush1.bf16.msra.mxu0 %v449
  %637 = vmatprep.subr.bf16.mxu0 0
  %638 = vmatpush1.bf16.msra.mxu0 %v450
  %639 = vmatprep.subr.bf16.mxu0 0
  %640 = vmatpush1.bf16.msra.mxu0 %v451
  %641 = vmatprep.subr.bf16.mxu0 0
  %642 = vmatpush1.bf16.msra.mxu0 %v452
  %643 = vmatprep.subr.bf16.mxu0 0
  %644 = vmatpush1.bf16.msra.mxu0 %v453
  %645 = vmatprep.subr.bf16.mxu0 0
  %646 = vmatpush1.bf16.msra.mxu0 %v454
  %647 = vmatprep.subr.bf16.mxu0 0
  %648 = vmatpush1.bf16.msra.mxu0 0
  %649 = vmatprep.subr.bf16.mxu0 0
  %650 = vmatpush1.bf16.msra.mxu0 0
  %651 = vmatprep.subr.bf16.mxu0 0
  %652 = vmatpush1.bf16.msra.mxu0 0
  %653 = vmatprep.subr.bf16.mxu0 0
  %654 = vmatpush1.bf16.msra.mxu0 0
  %655 = vmatprep.subr.bf16.mxu0 0
  %656 = vmatpush1.bf16.msra.mxu0 0
  %657 = vmatprep.subr.bf16.mxu0 0
  %658 = vmatpush1.bf16.msra.mxu0 0
  %659 = vmatprep.subr.bf16.mxu0 0
  %660 = vmatpush1.bf16.msra.mxu0 0
  %661 = vmatprep.subr.bf16.mxu0 0
  %662 = vmatpush1.bf16.msra.mxu0 0
  %663 = vmatprep.mubr.bf16.mxu0 0
  %664 = vmatmul.mubr.bf16.gmra.mrb[0].mxu0 %v167
  %v665 = vpop.f32.mrb[0].mxu0
  %v666 = vadd.f32 %v626, %v665
  %v667 = vpop.f32.mrb[0].mxu0
  %v668 = vpop.f32.mrb[0].mxu0
  %v669 = vpop.f32.mrb[0].mxu0
  %670 = vdwg.mxu0
  %v671 = vmax.f32 %v666, 0.0
  %v672 = vpack.c.bf16 %v671, %v671
  %v673 = vld [vmem:[%s3] sm:$0xf]
  %v674 = vld [vmem:[%s3 + $0x4] sm:$0xf]
  %v675 = vld [vmem:[%s3 + $0x8] sm:$0xf]
  %v676 = vld [vmem:[%s3 + $0xc] sm:$0xf]
  %v677 = vld [vmem:[%s3 + $0x10] sm:$0xf]
  %v678 = vld [vmem:[%s3 + $0x14] sm:$0xf]
  %v679 = vld [vmem:[%s3 + $0x18] sm:$0xf]
  %v680 = vld [vmem:[%s3 + $0x1c] sm:$0xf]
  %v681 = vld [vmem:[%s3 + $0x20] sm:$0xf]
  %v682 = vld [vmem:[%s3 + $0x24] sm:$0xf]
  %v683 = vld [vmem:[%s3 + $0x28] sm:$0xf]
  %v684 = vld [vmem:[%s3 + $0x2c] sm:$0xf]
  %v685 = vld [vmem:[%s3 + $0x30] sm:$0xf]
  %v686 = vld [vmem:[%s3 + $0x34] sm:$0xf]
  %v687 = vld [vmem:[%s3 + $0x38] sm:$0xf]
  %v688 = vld [vmem:[%s3 + $0x3c] sm:$0xf]
  %v689 = vld [vmem:[%s4] sm:$0x1]
  %v691 = vlaneseq
  %v692 = vshrl.u32 %v691, 7
  %v693 = vsub.s32 0, %v692
  %v694 = vrot.slane %v689, %v693
  %v712 = vunpack.c.l.b16 %v673
  %v713 = vunpack.c.l.b16 %v674
  %v714 = vunpack.c.l.b16 %v675
  %v715 = vunpack.c.l.b16 %v676
  %v716 = vunpack.c.l.b16 %v677
  %v717 = vunpack.c.l.b16 %v678
  %v718 = vunpack.c.l.b16 %v679
  %v719 = vunpack.c.l.b16 %v680
  %v720 = vunpack.c.l.b16 %v681
  %v721 = vunpack.c.l.b16 %v682
  %v722 = vunpack.c.l.b16 %v683
  %v723 = vunpack.c.l.b16 %v684
  %v724 = vunpack.c.l.b16 %v685
  %v725 = vunpack.c.l.b16 %v686
  %v726 = vunpack.c.l.b16 %v687
  %v727 = vunpack.c.l.b16 %v688
  %v728 = vpack.c.b16 %v713, %v712
  %v729 = vpack.c.b16 %v715, %v714
  %v730 = vpack.c.b16 %v717, %v716
  %v731 = vpack.c.b16 %v719, %v718
  %v732 = vpack.c.b16 %v721, %v720
  %v733 = vpack.c.b16 %v723, %v722
  %v734 = vpack.c.b16 %v725, %v724
  %v735 = vpack.c.b16 %v727, %v726
  %744 = vmatprep.subr.bf16.mxu0 0
  %745 = vmatpush1.bf16.msra.mxu0 %v728
  %746 = vmatprep.subr.bf16.mxu0 0
  %747 = vmatpush1.bf16.msra.mxu0 %v729
  %748 = vmatprep.subr.bf16.mxu0 0
  %749 = vmatpush1.bf16.msra.mxu0 %v730
  %750 = vmatprep.subr.bf16.mxu0 0
  %751 = vmatpush1.bf16.msra.mxu0 %v731
  %752 = vmatprep.subr.bf16.mxu0 0
  %753 = vmatpush1.bf16.msra.mxu0 %v732
  %754 = vmatprep.subr.bf16.mxu0 0
  %755 = vmatpush1.bf16.msra.mxu0 %v733
  %756 = vmatprep.subr.bf16.mxu0 0
  %757 = vmatpush1.bf16.msra.mxu0 %v734
  %758 = vmatprep.subr.bf16.mxu0 0
  %759 = vmatpush1.bf16.msra.mxu0 %v735
  %760 = vmatprep.subr.bf16.mxu0 0
  %761 = vmatpush1.bf16.msra.mxu0 0
  %762 = vmatprep.subr.bf16.mxu0 0
  %763 = vmatpush1.bf16.msra.mxu0 0
  %764 = vmatprep.subr.bf16.mxu0 0
  %765 = vmatpush1.bf16.msra.mxu0 0
  %766 = vmatprep.subr.bf16.mxu0 0
  %767 = vmatpush1.bf16.msra.mxu0 0
  %768 = vmatprep.subr.bf16.mxu0 0
  %769 = vmatpush1.bf16.msra.mxu0 0
  %770 = vmatprep.subr.bf16.mxu0 0
  %771 = vmatpush1.bf16.msra.mxu0 0
  %772 = vmatprep.subr.bf16.mxu0 0
  %773 = vmatpush1.bf16.msra.mxu0 0
  %774 = vmatprep.subr.bf16.mxu0 0
  %775 = vmatpush1.bf16.msra.mxu0 0
  %776 = vmatprep.mubr.bf16.mxu0 0
  %777 = vmatmul.mubr.bf16.gmra.mrb[0].mxu0 %v672
  %v778 = vpop.f32.mrb[0].mxu0
  %v779 = vadd.f32 %v694, %v778
  %v780 = vpop.f32.mrb[0].mxu0
  %v781 = vpop.f32.mrb[0].mxu0
  %v782 = vpop.f32.mrb[0].mxu0
  %783 = vdwg.mxu0
  %v784 = vmax.f32 %v779, 0.0
  %v785 = vpack.c.bf16 %v784, %v784
  %v786 = vld [vmem:[%s5] sm:$0xf]
  %v787 = vld [vmem:[%s5 + $0x4] sm:$0xf]
  %v788 = vld [vmem:[%s5 + $0x8] sm:$0xf]
  %v789 = vld [vmem:[%s5 + $0xc] sm:$0xf]
  %v790 = vld [vmem:[%s5 + $0x10] sm:$0xf]
  %v791 = vld [vmem:[%s5 + $0x14] sm:$0xf]
  %v792 = vld [vmem:[%s5 + $0x18] sm:$0xf]
  %v793 = vld [vmem:[%s5 + $0x1c] sm:$0xf]
  %v794 = vld [vmem:[%s5 + $0x20] sm:$0xf]
  %v795 = vld [vmem:[%s5 + $0x24] sm:$0xf]
  %v796 = vld [vmem:[%s5 + $0x28] sm:$0xf]
  %v797 = vld [vmem:[%s5 + $0x2c] sm:$0xf]
  %v798 = vld [vmem:[%s5 + $0x30] sm:$0xf]
  %v799 = vld [vmem:[%s5 + $0x34] sm:$0xf]
  %v800 = vld [vmem:[%s5 + $0x38] sm:$0xf]
  %v801 = vld [vmem:[%s5 + $0x3c] sm:$0xf]
  %v802 = vld [vmem:[%s6] sm:$0x1]
  %v804 = vlaneseq
  %v805 = vshrl.u32 %v804, 7
  %v806 = vsub.s32 0, %v805
  %v807 = vrot.slane %v802, %v806
  %v825 = vunpack.c.l.b16 %v786
  %v826 = vunpack.c.l.b16 %v787
  %v827 = vunpack.c.l.b16 %v788
  %v828 = vunpack.c.l.b16 %v789
  %v829 = vunpack.c.l.b16 %v790
  %v830 = vunpack.c.l.b16 %v791
  %v831 = vunpack.c.l.b16 %v792
  %v832 = vunpack.c.l.b16 %v793
  %v833 = vunpack.c.l.b16 %v794
  %v834 = vunpack.c.l.b16 %v795
  %v835 = vunpack.c.l.b16 %v796
  %v836 = vunpack.c.l.b16 %v797
  %v837 = vunpack.c.l.b16 %v798
  %v838 = vunpack.c.l.b16 %v799
  %v839 = vunpack.c.l.b16 %v800
  %v840 = vunpack.c.l.b16 %v801
  %v841 = vpack.c.b16 %v826, %v825
  %v842 = vpack.c.b16 %v828, %v827
  %v843 = vpack.c.b16 %v830, %v829
  %v844 = vpack.c.b16 %v832, %v831
  %v845 = vpack.c.b16 %v834, %v833
  %v846 = vpack.c.b16 %v836, %v835
  %v847 = vpack.c.b16 %v838, %v837
  %v848 = vpack.c.b16 %v840, %v839
  %857 = vmatprep.subr.bf16.mxu0 0
  %858 = vmatpush1.bf16.msra.mxu0 %v841
  %859 = vmatprep.subr.bf16.mxu0 0
  %860 = vmatpush1.bf16.msra.mxu0 %v842
  %861 = vmatprep.subr.bf16.mxu0 0
  %862 = vmatpush1.bf16.msra.mxu0 %v843
  %863 = vmatprep.subr.bf16.mxu0 0
  %864 = vmatpush1.bf16.msra.mxu0 %v844
  %865 = vmatprep.subr.bf16.mxu0 0
  %866 = vmatpush1.bf16.msra.mxu0 %v845
  %867 = vmatprep.subr.bf16.mxu0 0
  %868 = vmatpush1.bf16.msra.mxu0 %v846
  %869 = vmatprep.subr.bf16.mxu0 0
  %870 = vmatpush1.bf16.msra.mxu0 %v847
  %871 = vmatprep.subr.bf16.mxu0 0
  %872 = vmatpush1.bf16.msra.mxu0 %v848
  %873 = vmatprep.subr.bf16.mxu0 0
  %874 = vmatpush1.bf16.msra.mxu0 0
  %875 = vmatprep.subr.bf16.mxu0 0
  %876 = vmatpush1.bf16.msra.mxu0 0
  %877 = vmatprep.subr.bf16.mxu0 0
  %878 = vmatpush1.bf16.msra.mxu0 0
  %879 = vmatprep.subr.bf16.mxu0 0
  %880 = vmatpush1.bf16.msra.mxu0 0
  %881 = vmatprep.subr.bf16.mxu0 0
  %882 = vmatpush1.bf16.msra.mxu0 0
  %883 = vmatprep.subr.bf16.mxu0 0
  %884 = vmatpush1.bf16.msra.mxu0 0
  %885 = vmatprep.subr.bf16.mxu0 0
  %886 = vmatpush1.bf16.msra.mxu0 0
  %887 = vmatprep.subr.bf16.mxu0 0
  %888 = vmatpush1.bf16.msra.mxu0 0
  %889 = vmatprep.mubr.bf16.mxu0 0
  %890 = vmatmul.mubr.bf16.gmra.mrb[0].mxu0 %v785
  %v891 = vpop.f32.mrb[0].mxu0
  %v892 = vadd.f32 %v807, %v891
  %v893 = vpop.f32.mrb[0].mxu0
  %v894 = vpop.f32.mrb[0].mxu0
  %v895 = vpop.f32.mrb[0].mxu0
  %896 = vdwg.mxu0
  %897 = vmax.xlane.f32.xlu0 %v892
  %v898 = vpop.xlane.xlu0 %897
  %v899 = vsub.f32 %v892, %v898
  %v900 = vmul.f32 %v899, 1.442695
  %v901 = vpow.pop %v900
  %902 = vadd.xlane.f32.xlu0 %v901
  %v903 = vpop.xlane.xlu0 %902
  %v904 = vlog2.pop %v903
  %v905 = vmul.f32 %v904, 0.6931472
  %v906 = vadd.f32 %v898, %v905
  %v907 = vsub.f32 %v892, %v906
  %908 = vst [vmem:[%s7] sm:$0xff] %v907
  // Predicated region
  $region30: #{_mlp_forward_jit.1} parent=0 // pred_check
    _
  $region31: #{_mlp_forward_jit.1} parent=0 // pred_check_branch
    %910 = sbr.rel (0) target = $region33
  $region32: #{_mlp_forward_jit.1} parent=0 // pred_region
    _
  $region33: #{_mlp_forward_jit.1} parent=0 // pred_fallthru
    _
  // Predicated region
  $region34: #{_mlp_forward_jit.1} parent=0 // pred_check
    _
  $region35: #{_mlp_forward_jit.1} parent=0 // pred_check_branch
    %912 = sbr.rel (0) target = $region37
  $region36: #{_mlp_forward_jit.1} parent=0 // pred_region
    _
  $region37: #{_mlp_forward_jit.1} parent=0 // pred_fallthru
    _

</llo_original>
